<compile_context>
chip_gen: v6e
topology: v6e:2x2x1
jax: 0.10.0
libtpu: 0.0.40
codegen_flags: <defaults>
</compile_context>

<pallas_src>
import jax
import jax.numpy as jnp
from jax import lax
from jax.experimental import pallas as pl
from jax.experimental.pallas import tpu as pltpu

BN_EPS = 1e-5


def _bn_relu_fused(h_q, q, gamma, beta):
    """Training-mode BatchNorm1d + ReLU applied to a matmul output that is still
    in the quantized-weight domain (true pre-BN activation = h_q * q per output
    channel).  The per-channel dequant scale q and the BN affine are folded into
    ONE per-channel scale/shift, so the (B, N) tensor only sees mul + add + max.
    Exact: gamma*(q*h_q - q*mean_q)*rsqrt(q^2*var_q + eps) + beta."""
    mean_q = jnp.mean(h_q, axis=0, keepdims=True)
    var_q = jnp.maximum(jnp.mean(h_q * h_q, axis=0, keepdims=True)
                        - mean_q * mean_q, 0.0)
    scale = gamma * q * lax.rsqrt(q * q * var_q + BN_EPS)   # rsqrt -> EUP slot (free)
    shift = beta - mean_q * scale
    return jnp.maximum(h_q * scale + shift, 0.0)


def decoder_predict_kernel(x_ref, w1_ref, w23_ref, p_ref, o_ref):
    H1 = w1_ref.shape[1]              # 1024
    KH = w23_ref.shape[0]             # 512 (K-half of layer 2 == slab row count)
    H2 = KH                           # 512
    H3 = w23_ref.shape[1] - 2 * H2    # 256

    # Unpack the small parameters from the single packed (1, K) f32 input.
    # All offsets are static and 128-aligned.
    off = 0
    def take(n):
        nonlocal off
        v = p_ref[:, off:off + n]
        off += n
        return v

    g1, be1, q1 = take(H1), take(H1), take(H1)
    g2, be2, q2 = take(H2), take(H2), take(H2)
    g3, be3, q3 = take(H3), take(H3), take(H3)
    w4_row = take(H3)                 # final Linear weight as a (1, 256) f32 row
    b4 = take(1)

    x = x_ref[...]                    # already bf16 (pre-cast in the wrapper)

    # ---- layer 1: Linear(F, 1024) + BN + ReLU (int8 weights -> bf16 MXU) ----
    # Linear bias omitted: exactly cancelled by BN mean subtraction.
    h = jnp.dot(x, w1_ref[...].astype(jnp.bfloat16),
                preferred_element_type=jnp.float32)
    h = _bn_relu_fused(h, q1, g1, be1)

    # ---- layer 2: Linear(1024, 512) as two accumulating K-half matmuls ----
    hb = h.astype(jnp.bfloat16)
    h = (jnp.dot(hb[:, :KH], w23_ref[:, 0:H2].astype(jnp.bfloat16),
                 preferred_element_type=jnp.float32)
         + jnp.dot(hb[:, KH:], w23_ref[:, H2:2 * H2].astype(jnp.bfloat16),
                   preferred_element_type=jnp.float32))
    h = _bn_relu_fused(h, q2, g2, be2)

    # ---- layer 3: Linear(512, 256) + BN + ReLU ----
    h = jnp.dot(h.astype(jnp.bfloat16),
                w23_ref[:, 2 * H2:2 * H2 + H3].astype(jnp.bfloat16),
                preferred_element_type=jnp.float32)
    h = _bn_relu_fused(h, q3, g3, be3)

    # ---- head: Linear(256, 1) + ReLU. A 1-column MXU matmul wastes a full ----
    # MXU pass, so use a VPU multiply + cross-lane (XLU) reduce instead.
    out = jnp.sum(h * w4_row, axis=-1, keepdims=True) + b4
    o_ref[...] = jnp.maximum(out, 0.0)


def quantize_weight(w):
    """Symmetric per-output-channel int8 quantization of a (in, out) weight."""
    amax = jnp.max(jnp.abs(w), axis=0, keepdims=True)           # (1, out)
    qscale = (jnp.maximum(amax, 1e-30) / 127.0).astype(jnp.float32)
    w_q = jnp.clip(jnp.round(w / qscale), -127.0, 127.0).astype(jnp.int8)
    return w_q, qscale


def prepare_params(params):
    """One-time host-side prep: int8 weights (+ per-channel scales) and one packed
    f32 vector of all small per-channel parameters."""
    (w1, b1, g1, be1, w2, b2, g2, be2, w3, b3, g3, be3, w4, b4) = params
    # b1..b3 are dead under training-mode BN (cancelled by mean subtraction).
    del b1, b2, b3
    w1_q, q1 = quantize_weight(w1)
    w2_q, q2 = quantize_weight(w2)
    w3_q, q3 = quantize_weight(w3)
    # Pack w2 (as two stacked K-halves) and w3 into one contiguous int8 slab:
    # columns = [ w2 rows 0:512 | w2 rows 512:1024 | w3 ]  -> shape (512, 1280).
    kh = w2_q.shape[0] // 2
    w23 = jnp.concatenate([w2_q[:kh], w2_q[kh:], w3_q], axis=1)
    packed = jnp.concatenate(
        [g1, be1, q1, g2, be2, q2, g3, be3, q3, w4.T, b4],
        axis=1).astype(jnp.float32)
    return w1_q, w23, packed


def decoder_predict_forward(x, prepared):
    """x: (B, dim_bottleneck) f32; prepared: output of prepare_params."""
    w1_q, w23_q, packed = prepared
    B = x.shape[0]
    assert B % 8 == 0, "training-mode BN batch stats need B to be a multiple of 8 sublanes"
    xb = x.astype(jnp.bfloat16)      # halve the x DMA; MXU runs bf16 anyway
    args = (xb, w1_q, w23_q, packed)

    def full_spec(a):
        shp = a.shape
        return pl.BlockSpec(shp, lambda *_, n=len(shp): (0,) * n)

    return pl.pallas_call(
        decoder_predict_kernel,
        out_shape=jax.ShapeDtypeStruct((B, 1), jnp.float32),
        in_specs=[full_spec(a) for a in args],
        out_specs=pl.BlockSpec((B, 1), lambda: (0, 0)),
        compiler_params=pltpu.CompilerParams(vmem_limit_bytes=16 << 20),
    )(*args)


def init_params(key, dim_bottleneck):
    """Deterministic synthetic parameters, shapes matching the nn.Module (f32)."""
    dims = [dim_bottleneck, 1024, 512, 256, 1]
    params = []
    keys = jax.random.split(key, 16)
    ki = 0
    for li in range(4):
        fan_in, fan_out = dims[li], dims[li + 1]
        w = jax.random.normal(keys[ki], (fan_in, fan_out), jnp.float32) * (1.0 / jnp.sqrt(fan_in)); ki += 1
        b = jax.random.normal(keys[ki], (1, fan_out), jnp.float32) * 0.1; ki += 1
        params += [w, b]
        if li < 3:  # BatchNorm1d after the first three Linear layers
            g = 1.0 + 0.1 * jax.random.normal(keys[ki], (1, fan_out), jnp.float32); ki += 1
            be = 0.1 * jax.random.normal(keys[ki], (1, fan_out), jnp.float32); ki += 1
            params += [g, be]
    return tuple(params)


def _bn_relu_ref(h, gamma, beta):
    """Un-fused training-mode BatchNorm1d (biased variance) + ReLU."""
    mean = jnp.mean(h, axis=0, keepdims=True)
    var = jnp.mean(jnp.square(h - mean), axis=0, keepdims=True)
    return jnp.maximum(gamma * (h - mean) * lax.rsqrt(var + BN_EPS) + beta, 0.0)


def reference_forward(x, params, quant):
    """Pure-JAX reference with the same weight quantization and matmul dtypes as
    the kernel (int8 weights cast to bf16, f32 accumulation) but computed the
    straightforward way: explicit dequant, Linear biases b1..b3 included, un-fused
    training-mode BatchNorm.  This independently checks the bias-cancellation and
    dequant-scale-fold algebra used inside the kernel.  (Note: int8 weight
    quantization is an accepted accuracy tradeoff vs the f32 PyTorch module.)"""
    (w1, b1, g1, be1, w2, b2, g2, be2, w3, b3, g3, be3, w4, b4) = params
    (w1_q, q1), (w2_q, q2), (w3_q, q3) = quant

    def linear_q(h, w_q, q, b):
        hq = jnp.dot(h.astype(jnp.bfloat16), w_q.astype(jnp.bfloat16),
                     preferred_element_type=jnp.float32)
        return hq * q + b

    h = _bn_relu_ref(linear_q(x, w1_q, q1, b1), g1, be1)
    h = _bn_relu_ref(linear_q(h, w2_q, q2, b2), g2, be2)
    h = _bn_relu_ref(linear_q(h, w3_q, q3, b3), g3, be3)
    out = jnp.sum(h * w4.T, axis=-1, keepdims=True) + b4
    return jnp.maximum(out, 0.0)


if __name__ == "__main__":
    key = jax.random.PRNGKey(0)
    k_x, k_p = jax.random.split(key)

    # Small, module-consistent shapes: batch=8, dim_bottleneck=512 (module arg).
    B, DIM_BOTTLENECK = 8, 512
    x = jax.random.normal(k_x, (B, DIM_BOTTLENECK), jnp.float32)
    params = init_params(k_p, DIM_BOTTLENECK)
    prepared = prepare_params(params)

    out = decoder_predict_forward(x, prepared)
    out = jax.block_until_ready(out)

    quant = tuple(quantize_weight(w) for w in (params[0], params[4], params[8]))
    ref = reference_forward(x, params, quant)
    assert out.shape == (B, 1), out.shape
    assert jnp.allclose(out, ref, atol=2e-3, rtol=2e-3), "mismatch vs. JAX reference"

    print("KERNEL_OK")
</pallas_src>

<mosaic_0001>
module attributes {stable_mosaic.version = 11 : i64} {
  func.func @decoder_predict_kernel(%arg0: memref<8x512xbf16, #tpu.memory_space<vmem>>, %arg1: memref<512x1024xi8, #tpu.memory_space<vmem>>, %arg2: memref<512x1280xi8, #tpu.memory_space<vmem>>, %arg3: memref<1x5633xf32, #tpu.memory_space<vmem>>, %arg4: memref<8x1xf32, #tpu.memory_space<vmem>>) attributes {dimension_semantics = [], scalar_prefetch = 0 : i64, scratch_operands = 0 : i64, tpu.core_type = #tpu.core_type<tc>} {
    %c0 = arith.constant 0 : index
    %c0_0 = arith.constant 0 : index
    %0 = vector.load %arg3[%c0, %c0_0] : memref<1x5633xf32, #tpu.memory_space<vmem>>, vector<1x1024xf32>
    %c0_1 = arith.constant 0 : index
    %c1024 = arith.constant 1024 : index
    %1 = vector.load %arg3[%c0_1, %c1024] : memref<1x5633xf32, #tpu.memory_space<vmem>>, vector<1x1024xf32>
    %c0_2 = arith.constant 0 : index
    %c2048 = arith.constant 2048 : index
    %2 = vector.load %arg3[%c0_2, %c2048] : memref<1x5633xf32, #tpu.memory_space<vmem>>, vector<1x1024xf32>
    %c0_3 = arith.constant 0 : index
    %c3072 = arith.constant 3072 : index
    %3 = vector.load %arg3[%c0_3, %c3072] : memref<1x5633xf32, #tpu.memory_space<vmem>>, vector<1x512xf32>
    %c0_4 = arith.constant 0 : index
    %c3584 = arith.constant 3584 : index
    %4 = vector.load %arg3[%c0_4, %c3584] : memref<1x5633xf32, #tpu.memory_space<vmem>>, vector<1x512xf32>
    %c0_5 = arith.constant 0 : index
    %c4096 = arith.constant 4096 : index
    %5 = vector.load %arg3[%c0_5, %c4096] : memref<1x5633xf32, #tpu.memory_space<vmem>>, vector<1x512xf32>
    %c0_6 = arith.constant 0 : index
    %c4608 = arith.constant 4608 : index
    %6 = vector.load %arg3[%c0_6, %c4608] : memref<1x5633xf32, #tpu.memory_space<vmem>>, vector<1x256xf32>
    %c0_7 = arith.constant 0 : index
    %c4864 = arith.constant 4864 : index
    %7 = vector.load %arg3[%c0_7, %c4864] : memref<1x5633xf32, #tpu.memory_space<vmem>>, vector<1x256xf32>
    %c0_8 = arith.constant 0 : index
    %c5120 = arith.constant 5120 : index
    %8 = vector.load %arg3[%c0_8, %c5120] : memref<1x5633xf32, #tpu.memory_space<vmem>>, vector<1x256xf32>
    %c0_9 = arith.constant 0 : index
    %c5376 = arith.constant 5376 : index
    %9 = vector.load %arg3[%c0_9, %c5376] : memref<1x5633xf32, #tpu.memory_space<vmem>>, vector<1x256xf32>
    %c0_10 = arith.constant 0 : index
    %c5632 = arith.constant 5632 : index
    %10 = vector.load %arg3[%c0_10, %c5632] : memref<1x5633xf32, #tpu.memory_space<vmem>>, vector<1x1xf32>
    %c0_11 = arith.constant 0 : index
    %c0_12 = arith.constant 0 : index
    %11 = vector.load %arg0[%c0_11, %c0_12] : memref<8x512xbf16, #tpu.memory_space<vmem>>, vector<8x512xbf16>
    %c0_13 = arith.constant 0 : index
    %c0_14 = arith.constant 0 : index
    %12 = vector.load %arg1[%c0_13, %c0_14] : memref<512x1024xi8, #tpu.memory_space<vmem>>, vector<512x1024xi8>
    %13 = arith.sitofp %12 : vector<512x1024xi8> to vector<512x1024xbf16>
    %cst = arith.constant dense<0.000000e+00> : vector<8x1024xf32>
    %14 = tpu.matmul %11, %13, %cst {dimension_numbers = #tpu.dot_dimension_numbers<[1], [0], [0], [1], [0, 0, 1, 1], [], []>} : vector<8x512xbf16>, vector<512x1024xbf16>, vector<8x1024xf32> -> vector<8x1024xf32>
    %cst_15 = arith.constant dense<0.000000e+00> : vector<1024xf32>
    %15 = vector.multi_reduction <add>, %14, %cst_15 [0] : vector<8x1024xf32> to vector<1024xf32>
    %16 = vector.shape_cast %15 : vector<1024xf32> to vector<1x1024xf32>
    %cst_16 = arith.constant 8.000000e+00 : f32
    %17 = vector.broadcast %cst_16 : f32 to vector<1x1024xf32>
    %18 = arith.divf %16, %17 : vector<1x1024xf32>
    %19 = arith.mulf %14, %14 : vector<8x1024xf32>
    %cst_17 = arith.constant dense<0.000000e+00> : vector<1024xf32>
    %20 = vector.multi_reduction <add>, %19, %cst_17 [0] : vector<8x1024xf32> to vector<1024xf32>
    %21 = vector.shape_cast %20 : vector<1024xf32> to vector<1x1024xf32>
    %cst_18 = arith.constant 8.000000e+00 : f32
    %22 = vector.broadcast %cst_18 : f32 to vector<1x1024xf32>
    %23 = arith.divf %21, %22 : vector<1x1024xf32>
    %24 = arith.mulf %18, %18 : vector<1x1024xf32>
    %25 = arith.subf %23, %24 : vector<1x1024xf32>
    %cst_19 = arith.constant 0.000000e+00 : f32
    %26 = vector.broadcast %cst_19 : f32 to vector<1x1024xf32>
    %27 = arith.maximumf %25, %26 : vector<1x1024xf32>
    %28 = arith.mulf %0, %2 : vector<1x1024xf32>
    %29 = arith.mulf %2, %2 : vector<1x1024xf32>
    %30 = arith.mulf %29, %27 : vector<1x1024xf32>
    %cst_20 = arith.constant 9.99999974E-6 : f32
    %31 = vector.broadcast %cst_20 : f32 to vector<1x1024xf32>
    %32 = arith.addf %30, %31 : vector<1x1024xf32>
    %33 = math.rsqrt %32 : vector<1x1024xf32>
    %34 = arith.mulf %28, %33 : vector<1x1024xf32>
    %35 = arith.mulf %18, %34 : vector<1x1024xf32>
    %36 = arith.subf %1, %35 : vector<1x1024xf32>
    %37 = vector.broadcast %34 : vector<1x1024xf32> to vector<8x1024xf32>
    %38 = arith.mulf %14, %37 : vector<8x1024xf32>
    %39 = vector.broadcast %36 : vector<1x1024xf32> to vector<8x1024xf32>
    %40 = arith.addf %38, %39 : vector<8x1024xf32>
    %cst_21 = arith.constant 0.000000e+00 : f32
    %41 = vector.broadcast %cst_21 : f32 to vector<8x1024xf32>
    %42 = arith.maximumf %40, %41 : vector<8x1024xf32>
    %43 = arith.truncf %42 : vector<8x1024xf32> to vector<8x1024xbf16>
    %44 = vector.extract_strided_slice %43 {offsets = [0, 0], sizes = [8, 512], strides = [1, 1]} : vector<8x1024xbf16> to vector<8x512xbf16>
    %c0_22 = arith.constant 0 : index
    %c0_23 = arith.constant 0 : index
    %45 = vector.load %arg2[%c0_22, %c0_23] : memref<512x1280xi8, #tpu.memory_space<vmem>>, vector<512x512xi8>
    %46 = arith.sitofp %45 : vector<512x512xi8> to vector<512x512xbf16>
    %cst_24 = arith.constant dense<0.000000e+00> : vector<8x512xf32>
    %47 = tpu.matmul %44, %46, %cst_24 {dimension_numbers = #tpu.dot_dimension_numbers<[1], [0], [0], [1], [0, 0, 1, 1], [], []>} : vector<8x512xbf16>, vector<512x512xbf16>, vector<8x512xf32> -> vector<8x512xf32>
    %48 = vector.extract_strided_slice %43 {offsets = [0, 512], sizes = [8, 512], strides = [1, 1]} : vector<8x1024xbf16> to vector<8x512xbf16>
    %c0_25 = arith.constant 0 : index
    %c512 = arith.constant 512 : index
    %49 = vector.load %arg2[%c0_25, %c512] : memref<512x1280xi8, #tpu.memory_space<vmem>>, vector<512x512xi8>
    %50 = arith.sitofp %49 : vector<512x512xi8> to vector<512x512xbf16>
    %cst_26 = arith.constant dense<0.000000e+00> : vector<8x512xf32>
    %51 = tpu.matmul %48, %50, %cst_26 {dimension_numbers = #tpu.dot_dimension_numbers<[1], [0], [0], [1], [0, 0, 1, 1], [], []>} : vector<8x512xbf16>, vector<512x512xbf16>, vector<8x512xf32> -> vector<8x512xf32>
    %52 = arith.addf %47, %51 : vector<8x512xf32>
    %cst_27 = arith.constant dense<0.000000e+00> : vector<512xf32>
    %53 = vector.multi_reduction <add>, %52, %cst_27 [0] : vector<8x512xf32> to vector<512xf32>
    %54 = vector.shape_cast %53 : vector<512xf32> to vector<1x512xf32>
    %cst_28 = arith.constant 8.000000e+00 : f32
    %55 = vector.broadcast %cst_28 : f32 to vector<1x512xf32>
    %56 = arith.divf %54, %55 : vector<1x512xf32>
    %57 = arith.mulf %52, %52 : vector<8x512xf32>
    %cst_29 = arith.constant dense<0.000000e+00> : vector<512xf32>
    %58 = vector.multi_reduction <add>, %57, %cst_29 [0] : vector<8x512xf32> to vector<512xf32>
    %59 = vector.shape_cast %58 : vector<512xf32> to vector<1x512xf32>
    %cst_30 = arith.constant 8.000000e+00 : f32
    %60 = vector.broadcast %cst_30 : f32 to vector<1x512xf32>
    %61 = arith.divf %59, %60 : vector<1x512xf32>
    %62 = arith.mulf %56, %56 : vector<1x512xf32>
    %63 = arith.subf %61, %62 : vector<1x512xf32>
    %cst_31 = arith.constant 0.000000e+00 : f32
    %64 = vector.broadcast %cst_31 : f32 to vector<1x512xf32>
    %65 = arith.maximumf %63, %64 : vector<1x512xf32>
    %66 = arith.mulf %3, %5 : vector<1x512xf32>
    %67 = arith.mulf %5, %5 : vector<1x512xf32>
    %68 = arith.mulf %67, %65 : vector<1x512xf32>
    %cst_32 = arith.constant 9.99999974E-6 : f32
    %69 = vector.broadcast %cst_32 : f32 to vector<1x512xf32>
    %70 = arith.addf %68, %69 : vector<1x512xf32>
    %71 = math.rsqrt %70 : vector<1x512xf32>
    %72 = arith.mulf %66, %71 : vector<1x512xf32>
    %73 = arith.mulf %56, %72 : vector<1x512xf32>
    %74 = arith.subf %4, %73 : vector<1x512xf32>
    %75 = vector.broadcast %72 : vector<1x512xf32> to vector<8x512xf32>
    %76 = arith.mulf %52, %75 : vector<8x512xf32>
    %77 = vector.broadcast %74 : vector<1x512xf32> to vector<8x512xf32>
    %78 = arith.addf %76, %77 : vector<8x512xf32>
    %cst_33 = arith.constant 0.000000e+00 : f32
    %79 = vector.broadcast %cst_33 : f32 to vector<8x512xf32>
    %80 = arith.maximumf %78, %79 : vector<8x512xf32>
    %81 = arith.truncf %80 : vector<8x512xf32> to vector<8x512xbf16>
    %c0_34 = arith.constant 0 : index
    %c1024_35 = arith.constant 1024 : index
    %82 = vector.load %arg2[%c0_34, %c1024_35] : memref<512x1280xi8, #tpu.memory_space<vmem>>, vector<512x256xi8>
    %83 = arith.sitofp %82 : vector<512x256xi8> to vector<512x256xbf16>
    %cst_36 = arith.constant dense<0.000000e+00> : vector<8x256xf32>
    %84 = tpu.matmul %81, %83, %cst_36 {dimension_numbers = #tpu.dot_dimension_numbers<[1], [0], [0], [1], [0, 0, 1, 1], [], []>} : vector<8x512xbf16>, vector<512x256xbf16>, vector<8x256xf32> -> vector<8x256xf32>
    %cst_37 = arith.constant dense<0.000000e+00> : vector<256xf32>
    %85 = vector.multi_reduction <add>, %84, %cst_37 [0] : vector<8x256xf32> to vector<256xf32>
    %86 = vector.shape_cast %85 : vector<256xf32> to vector<1x256xf32>
    %cst_38 = arith.constant 8.000000e+00 : f32
    %87 = vector.broadcast %cst_38 : f32 to vector<1x256xf32>
    %88 = arith.divf %86, %87 : vector<1x256xf32>
    %89 = arith.mulf %84, %84 : vector<8x256xf32>
    %cst_39 = arith.constant dense<0.000000e+00> : vector<256xf32>
    %90 = vector.multi_reduction <add>, %89, %cst_39 [0] : vector<8x256xf32> to vector<256xf32>
    %91 = vector.shape_cast %90 : vector<256xf32> to vector<1x256xf32>
    %cst_40 = arith.constant 8.000000e+00 : f32
    %92 = vector.broadcast %cst_40 : f32 to vector<1x256xf32>
    %93 = arith.divf %91, %92 : vector<1x256xf32>
    %94 = arith.mulf %88, %88 : vector<1x256xf32>
    %95 = arith.subf %93, %94 : vector<1x256xf32>
    %cst_41 = arith.constant 0.000000e+00 : f32
    %96 = vector.broadcast %cst_41 : f32 to vector<1x256xf32>
    %97 = arith.maximumf %95, %96 : vector<1x256xf32>
    %98 = arith.mulf %6, %8 : vector<1x256xf32>
    %99 = arith.mulf %8, %8 : vector<1x256xf32>
    %100 = arith.mulf %99, %97 : vector<1x256xf32>
    %cst_42 = arith.constant 9.99999974E-6 : f32
    %101 = vector.broadcast %cst_42 : f32 to vector<1x256xf32>
    %102 = arith.addf %100, %101 : vector<1x256xf32>
    %103 = math.rsqrt %102 : vector<1x256xf32>
    %104 = arith.mulf %98, %103 : vector<1x256xf32>
    %105 = arith.mulf %88, %104 : vector<1x256xf32>
    %106 = arith.subf %7, %105 : vector<1x256xf32>
    %107 = vector.broadcast %104 : vector<1x256xf32> to vector<8x256xf32>
    %108 = arith.mulf %84, %107 : vector<8x256xf32>
    %109 = vector.broadcast %106 : vector<1x256xf32> to vector<8x256xf32>
    %110 = arith.addf %108, %109 : vector<8x256xf32>
    %cst_43 = arith.constant 0.000000e+00 : f32
    %111 = vector.broadcast %cst_43 : f32 to vector<8x256xf32>
    %112 = arith.maximumf %110, %111 : vector<8x256xf32>
    %113 = vector.broadcast %9 : vector<1x256xf32> to vector<8x256xf32>
    %114 = arith.mulf %112, %113 : vector<8x256xf32>
    %cst_44 = arith.constant dense<0.000000e+00> : vector<8xf32>
    %115 = vector.multi_reduction <add>, %114, %cst_44 [1] : vector<8x256xf32> to vector<8xf32>
    %116 = vector.shape_cast %115 : vector<8xf32> to vector<8x1xf32>
    %117 = vector.broadcast %10 : vector<1x1xf32> to vector<8x1xf32>
    %118 = arith.addf %116, %117 : vector<8x1xf32>
    %cst_45 = arith.constant 0.000000e+00 : f32
    %119 = vector.broadcast %cst_45 : f32 to vector<8x1xf32>
    %120 = arith.maximumf %118, %119 : vector<8x1xf32>
    %c0_46 = arith.constant 0 : index
    %c0_47 = arith.constant 0 : index
    %121 = vector.load %arg4[%c0_46, %c0_47] : memref<8x1xf32, #tpu.memory_space<vmem>>, vector<8x1xf32>
    tpu.vector_store %arg4[%c0_46, %c0_47], %120 {strides = array<i32>} : memref<8x1xf32, #tpu.memory_space<vmem>>, vector<8x1xf32>,
    return
  }
}

</mosaic_0001>

<llo_original>
// kernel: tpu_custom_call.1
$region0: #{tpu_custom_call.1}
  #allocation0 [shape = 'u32[]', space=smem, size = 0x4, offset = 0x4, fixed_abs, tag = 'smem constant byte address 0x4 - core index']
  #allocation1 [shape = 'u32[144,128]{1,0:T(1,128)}', space=vmem, size = 0x12000, scoped, tag = 'internal scratch']
  %s0 = inlined_call_operand.hbm [shape: bf16[8,512], index: 0, kind: input, shape index: {}]
  %s1 = inlined_call_operand.hbm [shape: s8[512,1024], index: 1, kind: input, shape index: {}]
  %s2 = inlined_call_operand.hbm [shape: s8[512,1280], index: 2, kind: input, shape index: {}]
  %s3 = inlined_call_operand.hbm [shape: f32[1,5633], index: 3, kind: input, shape index: {}]
  %s4 = inlined_call_operand.vmem [shape: f32[8,1], index: 4, kind: output, shape index: {}]
  %s5 = sld [smem:[#allocation0]]
  $region42: #{tpu_custom_call.1} parent=0
    _
  %s7 = ssub.s32 1, %s5
  %s8 = scalar_select 0, %s7, %s5
  $region1: #{tpu_custom_call.1} parent=0
    #allocation2 [shape = 'u8[8192]{0}', space=vmem, size = 0x2000, scoped, tag = 'input window, operand 0, single buffered']
    #allocation3 [shape = 's32[1]{0}', space=sflag, size = 0x4, scoped, tag = 'scoped memory for tpu_custom_call.1']
    #allocation4 [shape = 'u8[524288]{0}', space=vmem, size = 0x80000, scoped, tag = 'input window, operand 1, single buffered']
    #allocation5 [shape = 's32[1]{0}', space=sflag, size = 0x4, scoped, tag = 'scoped memory for tpu_custom_call.1']
    #allocation6 [shape = 'u8[655360]{0}', space=vmem, size = 0xa0000, scoped, tag = 'input window, operand 2, single buffered']
    #allocation7 [shape = 'u8[23040]{0}', space=vmem, size = 0x5c00, scoped, tag = 'input window, operand 3, single buffered']
    #allocation8 [shape = 's32[1]{0}', space=sflag, size = 0x4, scoped, tag = 'scoped memory for tpu_custom_call.1']
    %9 = vsyncpa [#allocation3], 0
    %10 = vsyncpa [#allocation5], 0
    %11 = vsyncpa [#allocation8], 0
    // Predicated region
    $region2: #{tpu_custom_call.1} parent=1 // pred_check
      _
    $region3: #{tpu_custom_call.1} parent=1 // pred_check_branch
      %13 = sbr.rel (0) target = $region5
    $region4: #{tpu_custom_call.1} parent=1 // pred_region
      %s15 = ssub.s32 256, 256
      %16 = vsyncadd [#allocation3], %s15
      %s18 = sshll.u32 [#allocation2], 4
      %s19 = int_to_ptr.vmem [resolvable:$true] %s18
      %21 = dma.hbm_to_vmem [thread:$0]  %s0, 256, %s19, [#allocation3]
    $region5: #{tpu_custom_call.1} parent=1 // pred_fallthru
      _
    // Predicated region
    $region6: #{tpu_custom_call.1} parent=1 // pred_check
      _
    $region7: #{tpu_custom_call.1} parent=1 // pred_check_branch
      %23 = sbr.rel (0) target = $region9
    $region8: #{tpu_custom_call.1} parent=1 // pred_region
      %s25 = ssub.s32 16384, 16384
      %26 = vsyncadd [#allocation5], %s25
      %s27 = sshll.u32 [#allocation4], 4
      %s28 = int_to_ptr.vmem [resolvable:$true] %s27
      %33 = dma.hbm_to_vmem [thread:$0]  %s1, 16384, %s28, [#allocation5], 1024, 1024, 64
    $region9: #{tpu_custom_call.1} parent=1 // pred_fallthru
      _
    // Predicated region
    $region10: #{tpu_custom_call.1} parent=1 // pred_check
      _
    $region11: #{tpu_custom_call.1} parent=1 // pred_check_branch
      %35 = sbr.rel (0) target = $region13
    $region12: #{tpu_custom_call.1} parent=1 // pred_region
      %s37 = ssub.s32 20480, 20480
      %38 = vsyncadd [#allocation5], %s37
      %s39 = sshll.u32 [#allocation6], 4
      %s40 = int_to_ptr.vmem [resolvable:$true] %s39
      %45 = dma.hbm_to_vmem [thread:$0]  %s2, 20480, %s40, [#allocation5], 1280, 1280, 80
    $region13: #{tpu_custom_call.1} parent=1 // pred_fallthru
      _
    // Predicated region
    $region14: #{tpu_custom_call.1} parent=1 // pred_check
      _
    $region15: #{tpu_custom_call.1} parent=1 // pred_check_branch
      %47 = sbr.rel (0) target = $region17
    $region16: #{tpu_custom_call.1} parent=1 // pred_region
      %s49 = ssub.s32 720, 720
      %50 = vsyncadd [#allocation8], %s49
      %s52 = sshll.u32 [#allocation7], 4
      %s53 = int_to_ptr.vmem [resolvable:$true] %s52
      %55 = dma.hbm_to_vmem [thread:$0]  %s3, 720, %s53, [#allocation8]
    $region17: #{tpu_custom_call.1} parent=1 // pred_fallthru
      _
    // Predicated region
    $region18: #{tpu_custom_call.1} parent=1 // pred_check
      _
    $region19: #{tpu_custom_call.1} parent=1 // pred_check_branch
      %57 = sbr.rel (0) target = $region21
    $region20: #{tpu_custom_call.1} parent=1 // pred_region
      %58 = dma.done [#allocation3], 256
    $region21: #{tpu_custom_call.1} parent=1 // pred_fallthru
      _
    // Predicated region
    $region22: #{tpu_custom_call.1} parent=1 // pred_check
      _
    $region23: #{tpu_custom_call.1} parent=1 // pred_check_branch
      %60 = sbr.rel (0) target = $region25
    $region24: #{tpu_custom_call.1} parent=1 // pred_region
      %61 = dma.done [#allocation5], 16384
    $region25: #{tpu_custom_call.1} parent=1 // pred_fallthru
      _
    // Predicated region
    $region26: #{tpu_custom_call.1} parent=1 // pred_check
      _
    $region27: #{tpu_custom_call.1} parent=1 // pred_check_branch
      %63 = sbr.rel (0) target = $region29
    $region28: #{tpu_custom_call.1} parent=1 // pred_region
      %64 = dma.done [#allocation5], 20480
    $region29: #{tpu_custom_call.1} parent=1 // pred_fallthru
      _
    // Predicated region
    $region30: #{tpu_custom_call.1} parent=1 // pred_check
      _
    $region31: #{tpu_custom_call.1} parent=1 // pred_check_branch
      %66 = sbr.rel (0) target = $region33
    $region32: #{tpu_custom_call.1} parent=1 // pred_region
      %67 = dma.done [#allocation8], 720
    $region33: #{tpu_custom_call.1} parent=1 // pred_fallthru
      _
    %v68 = vld [vmem:[#allocation7] sm:$0xff]
    %v69 = vld [vmem:[#allocation7 + $0x8] sm:$0xff]
    %v70 = vld [vmem:[#allocation7 + $0x10] sm:$0xff]
    %v71 = vld [vmem:[#allocation7 + $0x18] sm:$0xf]
    %v72 = vld [vmem:[#allocation7 + $0x1c] sm:$0xf]
    %v73 = vld [vmem:[#allocation7 + $0x20] sm:$0xf]
    %v74 = vld [vmem:[#allocation7 + $0x24] sm:$0x3]
    %v75 = vld [vmem:[#allocation7 + $0x26] sm:$0x3]
    %v76 = vld [vmem:[#allocation7 + $0x28] sm:$0x3]
    %v77 = vld [vmem:[#allocation7 + $0x2a] sm:$0x3]
    %v78 = vld [vmem:[#allocation7 + $0x2c] sm:$0x1]
    %v79 = vld [vmem:[#allocation2] sm:$0xff]
    %v80 = vld [vmem:[#allocation2 + $0x8] sm:$0xff]
    %v81 = vld [vmem:[#allocation4] sm:$0xff]
    %v82 = vld [vmem:[#allocation4 + $0x8] sm:$0xff]
    %v83 = vld [vmem:[#allocation4 + $0x10] sm:$0xff]
    %v84 = vld [vmem:[#allocation4 + $0x18] sm:$0xff]
    %v85 = vld [vmem:[#allocation4 + $0x20] sm:$0xff]
    %v86 = vld [vmem:[#allocation4 + $0x28] sm:$0xff]
    %v87 = vld [vmem:[#allocation4 + $0x30] sm:$0xff]
    %v88 = vld [vmem:[#allocation4 + $0x38] sm:$0xff]
    %v89 = vld [vmem:[#allocation4 + $0x40] sm:$0xff]
    %v90 = vld [vmem:[#allocation4 + $0x48] sm:$0xff]
    %v91 = vld [vmem:[#allocation4 + $0x50] sm:$0xff]
    %v92 = vld [vmem:[#allocation4 + $0x58] sm:$0xff]
    %v93 = vld [vmem:[#allocation4 + $0x60] sm:$0xff]
    %v94 = vld [vmem:[#allocation4 + $0x68] sm:$0xff]
    %v95 = vld [vmem:[#allocation4 + $0x70] sm:$0xff]
    %v96 = vld [vmem:[#allocation4 + $0x78] sm:$0xff]
    %v97 = vld [vmem:[#allocation4 + $0x80] sm:$0xff]
    %v98 = vld [vmem:[#allocation4 + $0x88] sm:$0xff]
    %v99 = vld [vmem:[#allocation4 + $0x90] sm:$0xff]
    %v100 = vld [vmem:[#allocation4 + $0x98] sm:$0xff]
    %v101 = vld [vmem:[#allocation4 + $0xa0] sm:$0xff]
    %v102 = vld [vmem:[#allocation4 + $0xa8] sm:$0xff]
    %v103 = vld [vmem:[#allocation4 + $0xb0] sm:$0xff]
    %v104 = vld [vmem:[#allocation4 + $0xb8] sm:$0xff]
    %v105 = vld [vmem:[#allocation4 + $0xc0] sm:$0xff]
    %v106 = vld [vmem:[#allocation4 + $0xc8] sm:$0xff]
    %v107 = vld [vmem:[#allocation4 + $0xd0] sm:$0xff]
    %v108 = vld [vmem:[#allocation4 + $0xd8] sm:$0xff]
    %v109 = vld [vmem:[#allocation4 + $0xe0] sm:$0xff]
    %v110 = vld [vmem:[#allocation4 + $0xe8] sm:$0xff]
    %v111 = vld [vmem:[#allocation4 + $0xf0] sm:$0xff]
    %v112 = vld [vmem:[#allocation4 + $0xf8] sm:$0xff]
    %v113 = vld [vmem:[#allocation4 + $0x100] sm:$0xff]
    %v114 = vld [vmem:[#allocation4 + $0x108] sm:$0xff]
    %v115 = vld [vmem:[#allocation4 + $0x110] sm:$0xff]
    %v116 = vld [vmem:[#allocation4 + $0x118] sm:$0xff]
    %v117 = vld [vmem:[#allocation4 + $0x120] sm:$0xff]
    %v118 = vld [vmem:[#allocation4 + $0x128] sm:$0xff]
    %v119 = vld [vmem:[#allocation4 + $0x130] sm:$0xff]
    %v120 = vld [vmem:[#allocation4 + $0x138] sm:$0xff]
    %v121 = vld [vmem:[#allocation4 + $0x140] sm:$0xff]
    %v122 = vld [vmem:[#allocation4 + $0x148] sm:$0xff]
    %v123 = vld [vmem:[#allocation4 + $0x150] sm:$0xff]
    %v124 = vld [vmem:[#allocation4 + $0x158] sm:$0xff]
    %v125 = vld [vmem:[#allocation4 + $0x160] sm:$0xff]
    %v126 = vld [vmem:[#allocation4 + $0x168] sm:$0xff]
    %v127 = vld [vmem:[#allocation4 + $0x170] sm:$0xff]
    %v128 = vld [vmem:[#allocation4 + $0x178] sm:$0xff]
    %v129 = vld [vmem:[#allocation4 + $0x180] sm:$0xff]
    %v130 = vld [vmem:[#allocation4 + $0x188] sm:$0xff]
    %v131 = vld [vmem:[#allocation4 + $0x190] sm:$0xff]
    %v132 = vld [vmem:[#allocation4 + $0x198] sm:$0xff]
    %v133 = vld [vmem:[#allocation4 + $0x1a0] sm:$0xff]
    %v134 = vld [vmem:[#allocation4 + $0x1a8] sm:$0xff]
    %v135 = vld [vmem:[#allocation4 + $0x1b0] sm:$0xff]
    %v136 = vld [vmem:[#allocation4 + $0x1b8] sm:$0xff]
    %v137 = vld [vmem:[#allocation4 + $0x1c0] sm:$0xff]
    %v138 = vld [vmem:[#allocation4 + $0x1c8] sm:$0xff]
    %v139 = vld [vmem:[#allocation4 + $0x1d0] sm:$0xff]
    %v140 = vld [vmem:[#allocation4 + $0x1d8] sm:$0xff]
    %v141 = vld [vmem:[#allocation4 + $0x1e0] sm:$0xff]
    %v142 = vld [vmem:[#allocation4 + $0x1e8] sm:$0xff]
    %v143 = vld [vmem:[#allocation4 + $0x1f0] sm:$0xff]
    %v144 = vld [vmem:[#allocation4 + $0x1f8] sm:$0xff]
    %v145 = vld [vmem:[#allocation4 + $0x200] sm:$0xff]
    %v146 = vld [vmem:[#allocation4 + $0x208] sm:$0xff]
    %v147 = vld [vmem:[#allocation4 + $0x210] sm:$0xff]
    %v148 = vld [vmem:[#allocation4 + $0x218] sm:$0xff]
    %v149 = vld [vmem:[#allocation4 + $0x220] sm:$0xff]
    %v150 = vld [vmem:[#allocation4 + $0x228] sm:$0xff]
    %v151 = vld [vmem:[#allocation4 + $0x230] sm:$0xff]
    %v152 = vld [vmem:[#allocation4 + $0x238] sm:$0xff]
    %v153 = vld [vmem:[#allocation4 + $0x240] sm:$0xff]
    %v154 = vld [vmem:[#allocation4 + $0x248] sm:$0xff]
    %v155 = vld [vmem:[#allocation4 + $0x250] sm:$0xff]
    %v156 = vld [vmem:[#allocation4 + $0x258] sm:$0xff]
    %v157 = vld [vmem:[#allocation4 + $0x260] sm:$0xff]
    %v158 = vld [vmem:[#allocation4 + $0x268] sm:$0xff]
    %v159 = vld [vmem:[#allocation4 + $0x270] sm:$0xff]
    %v160 = vld [vmem:[#allocation4 + $0x278] sm:$0xff]
    %v161 = vld [vmem:[#allocation4 + $0x280] sm:$0xff]
    %v162 = vld [vmem:[#allocation4 + $0x288] sm:$0xff]
    %v163 = vld [vmem:[#allocation4 + $0x290] sm:$0xff]
    %v164 = vld [vmem:[#allocation4 + $0x298] sm:$0xff]
    %v165 = vld [vmem:[#allocation4 + $0x2a0] sm:$0xff]
    %v166 = vld [vmem:[#allocation4 + $0x2a8] sm:$0xff]
    %v167 = vld [vmem:[#allocation4 + $0x2b0] sm:$0xff]
    %v168 = vld [vmem:[#allocation4 + $0x2b8] sm:$0xff]
    %v169 = vld [vmem:[#allocation4 + $0x2c0] sm:$0xff]
    %v170 = vld [vmem:[#allocation4 + $0x2c8] sm:$0xff]
    %v171 = vld [vmem:[#allocation4 + $0x2d0] sm:$0xff]
    %v172 = vld [vmem:[#allocation4 + $0x2d8] sm:$0xff]
    %v173 = vld [vmem:[#allocation4 + $0x2e0] sm:$0xff]
    %v174 = vld [vmem:[#allocation4 + $0x2e8] sm:$0xff]
    %v175 = vld [vmem:[#allocation4 + $0x2f0] sm:$0xff]
    %v176 = vld [vmem:[#allocation4 + $0x2f8] sm:$0xff]
    %v177 = vld [vmem:[#allocation4 + $0x300] sm:$0xff]
    %v178 = vld [vmem:[#allocation4 + $0x308] sm:$0xff]
    %v179 = vld [vmem:[#allocation4 + $0x310] sm:$0xff]
    %v180 = vld [vmem:[#allocation4 + $0x318] sm:$0xff]
    %v181 = vld [vmem:[#allocation4 + $0x320] sm:$0xff]
    %v182 = vld [vmem:[#allocation4 + $0x328] sm:$0xff]
    %v183 = vld [vmem:[#allocation4 + $0x330] sm:$0xff]
    %v184 = vld [vmem:[#allocation4 + $0x338] sm:$0xff]
    %v185 = vld [vmem:[#allocation4 + $0x340] sm:$0xff]
    %v186 = vld [vmem:[#allocation4 + $0x348] sm:$0xff]
    %v187 = vld [vmem:[#allocation4 + $0x350] sm:$0xff]
    %v188 = vld [vmem:[#allocation4 + $0x358] sm:$0xff]
    %v189 = vld [vmem:[#allocation4 + $0x360] sm:$0xff]
    %v190 = vld [vmem:[#allocation4 + $0x368] sm:$0xff]
    %v191 = vld [vmem:[#allocation4 + $0x370] sm:$0xff]
    %v192 = vld [vmem:[#allocation4 + $0x378] sm:$0xff]
    %v193 = vld [vmem:[#allocation4 + $0x380] sm:$0xff]
    %v194 = vld [vmem:[#allocation4 + $0x388] sm:$0xff]
    %v195 = vld [vmem:[#allocation4 + $0x390] sm:$0xff]
    %v196 = vld [vmem:[#allocation4 + $0x398] sm:$0xff]
    %v197 = vld [vmem:[#allocation4 + $0x3a0] sm:$0xff]
    %v198 = vld [vmem:[#allocation4 + $0x3a8] sm:$0xff]
    %v199 = vld [vmem:[#allocation4 + $0x3b0] sm:$0xff]
    %v200 = vld [vmem:[#allocation4 + $0x3b8] sm:$0xff]
    %v201 = vld [vmem:[#allocation4 + $0x3c0] sm:$0xff]
    %v202 = vld [vmem:[#allocation4 + $0x3c8] sm:$0xff]
    %v203 = vld [vmem:[#allocation4 + $0x3d0] sm:$0xff]
    %v204 = vld [vmem:[#allocation4 + $0x3d8] sm:$0xff]
    %v205 = vld [vmem:[#allocation4 + $0x3e0] sm:$0xff]
    %v206 = vld [vmem:[#allocation4 + $0x3e8] sm:$0xff]
    %v207 = vld [vmem:[#allocation4 + $0x3f0] sm:$0xff]
    %v208 = vld [vmem:[#allocation4 + $0x3f8] sm:$0xff]
    %v209 = vunpack.c.l.s8.bf16 %v81
    %v210 = vunpack.c.l.s8.bf16 %v82
    %v211 = vunpack.c.l.s8.bf16 %v83
    %v212 = vunpack.c.l.s8.bf16 %v84
    %v213 = vunpack.c.l.s8.bf16 %v85
    %v214 = vunpack.c.l.s8.bf16 %v86
    %v215 = vunpack.c.l.s8.bf16 %v87
    %v216 = vunpack.c.l.s8.bf16 %v88
    %v217 = vunpack.c.h.s8.bf16 %v81
    %v218 = vunpack.c.h.s8.bf16 %v82
    %v219 = vunpack.c.h.s8.bf16 %v83
    %v220 = vunpack.c.h.s8.bf16 %v84
    %v221 = vunpack.c.h.s8.bf16 %v85
    %v222 = vunpack.c.h.s8.bf16 %v86
    %v223 = vunpack.c.h.s8.bf16 %v87
    %v224 = vunpack.c.h.s8.bf16 %v88
    %v225 = vunpack.c.l.s8.bf16 %v89
    %v226 = vunpack.c.l.s8.bf16 %v90
    %v227 = vunpack.c.l.s8.bf16 %v91
    %v228 = vunpack.c.l.s8.bf16 %v92
    %v229 = vunpack.c.l.s8.bf16 %v93
    %v230 = vunpack.c.l.s8.bf16 %v94
    %v231 = vunpack.c.l.s8.bf16 %v95
    %v232 = vunpack.c.l.s8.bf16 %v96
    %v233 = vunpack.c.h.s8.bf16 %v89
    %v234 = vunpack.c.h.s8.bf16 %v90
    %v235 = vunpack.c.h.s8.bf16 %v91
    %v236 = vunpack.c.h.s8.bf16 %v92
    %v237 = vunpack.c.h.s8.bf16 %v93
    %v238 = vunpack.c.h.s8.bf16 %v94
    %v239 = vunpack.c.h.s8.bf16 %v95
    %v240 = vunpack.c.h.s8.bf16 %v96
    %v241 = vunpack.c.l.s8.bf16 %v97
    %v242 = vunpack.c.l.s8.bf16 %v98
    %v243 = vunpack.c.l.s8.bf16 %v99
    %v244 = vunpack.c.l.s8.bf16 %v100
    %v245 = vunpack.c.l.s8.bf16 %v101
    %v246 = vunpack.c.l.s8.bf16 %v102
    %v247 = vunpack.c.l.s8.bf16 %v103
    %v248 = vunpack.c.l.s8.bf16 %v104
    %v249 = vunpack.c.h.s8.bf16 %v97
    %v250 = vunpack.c.h.s8.bf16 %v98
    %v251 = vunpack.c.h.s8.bf16 %v99
    %v252 = vunpack.c.h.s8.bf16 %v100
    %v253 = vunpack.c.h.s8.bf16 %v101
    %v254 = vunpack.c.h.s8.bf16 %v102
    %v255 = vunpack.c.h.s8.bf16 %v103
    %v256 = vunpack.c.h.s8.bf16 %v104
    %v257 = vunpack.c.l.s8.bf16 %v105
    %v258 = vunpack.c.l.s8.bf16 %v106
    %v259 = vunpack.c.l.s8.bf16 %v107
    %v260 = vunpack.c.l.s8.bf16 %v108
    %v261 = vunpack.c.l.s8.bf16 %v109
    %v262 = vunpack.c.l.s8.bf16 %v110
    %v263 = vunpack.c.l.s8.bf16 %v111
    %v264 = vunpack.c.l.s8.bf16 %v112
    %v265 = vunpack.c.h.s8.bf16 %v105
    %v266 = vunpack.c.h.s8.bf16 %v106
    %v267 = vunpack.c.h.s8.bf16 %v107
    %v268 = vunpack.c.h.s8.bf16 %v108
    %v269 = vunpack.c.h.s8.bf16 %v109
    %v270 = vunpack.c.h.s8.bf16 %v110
    %v271 = vunpack.c.h.s8.bf16 %v111
    %v272 = vunpack.c.h.s8.bf16 %v112
    %v273 = vunpack.c.l.s8.bf16 %v113
    %v274 = vunpack.c.l.s8.bf16 %v114
    %v275 = vunpack.c.l.s8.bf16 %v115
    %v276 = vunpack.c.l.s8.bf16 %v116
    %v277 = vunpack.c.l.s8.bf16 %v117
    %v278 = vunpack.c.l.s8.bf16 %v118
    %v279 = vunpack.c.l.s8.bf16 %v119
    %v280 = vunpack.c.l.s8.bf16 %v120
    %v281 = vunpack.c.h.s8.bf16 %v113
    %v282 = vunpack.c.h.s8.bf16 %v114
    %v283 = vunpack.c.h.s8.bf16 %v115
    %v284 = vunpack.c.h.s8.bf16 %v116
    %v285 = vunpack.c.h.s8.bf16 %v117
    %v286 = vunpack.c.h.s8.bf16 %v118
    %v287 = vunpack.c.h.s8.bf16 %v119
    %v288 = vunpack.c.h.s8.bf16 %v120
    %v289 = vunpack.c.l.s8.bf16 %v121
    %v290 = vunpack.c.l.s8.bf16 %v122
    %v291 = vunpack.c.l.s8.bf16 %v123
    %v292 = vunpack.c.l.s8.bf16 %v124
    %v293 = vunpack.c.l.s8.bf16 %v125
    %v294 = vunpack.c.l.s8.bf16 %v126
    %v295 = vunpack.c.l.s8.bf16 %v127
    %v296 = vunpack.c.l.s8.bf16 %v128
    %v297 = vunpack.c.h.s8.bf16 %v121
    %v298 = vunpack.c.h.s8.bf16 %v122
    %v299 = vunpack.c.h.s8.bf16 %v123
    %v300 = vunpack.c.h.s8.bf16 %v124
    %v301 = vunpack.c.h.s8.bf16 %v125
    %v302 = vunpack.c.h.s8.bf16 %v126
    %v303 = vunpack.c.h.s8.bf16 %v127
    %v304 = vunpack.c.h.s8.bf16 %v128
    %v305 = vunpack.c.l.s8.bf16 %v129
    %v306 = vunpack.c.l.s8.bf16 %v130
    %v307 = vunpack.c.l.s8.bf16 %v131
    %v308 = vunpack.c.l.s8.bf16 %v132
    %v309 = vunpack.c.l.s8.bf16 %v133
    %v310 = vunpack.c.l.s8.bf16 %v134
    %v311 = vunpack.c.l.s8.bf16 %v135
    %v312 = vunpack.c.l.s8.bf16 %v136
    %v313 = vunpack.c.h.s8.bf16 %v129
    %v314 = vunpack.c.h.s8.bf16 %v130
    %v315 = vunpack.c.h.s8.bf16 %v131
    %v316 = vunpack.c.h.s8.bf16 %v132
    %v317 = vunpack.c.h.s8.bf16 %v133
    %v318 = vunpack.c.h.s8.bf16 %v134
    %v319 = vunpack.c.h.s8.bf16 %v135
    %v320 = vunpack.c.h.s8.bf16 %v136
    %v321 = vunpack.c.l.s8.bf16 %v137
    %v322 = vunpack.c.l.s8.bf16 %v138
    %v323 = vunpack.c.l.s8.bf16 %v139
    %v324 = vunpack.c.l.s8.bf16 %v140
    %v325 = vunpack.c.l.s8.bf16 %v141
    %v326 = vunpack.c.l.s8.bf16 %v142
    %v327 = vunpack.c.l.s8.bf16 %v143
    %v328 = vunpack.c.l.s8.bf16 %v144
    %v329 = vunpack.c.h.s8.bf16 %v137
    %v330 = vunpack.c.h.s8.bf16 %v138
    %v331 = vunpack.c.h.s8.bf16 %v139
    %v332 = vunpack.c.h.s8.bf16 %v140
    %v333 = vunpack.c.h.s8.bf16 %v141
    %v334 = vunpack.c.h.s8.bf16 %v142
    %v335 = vunpack.c.h.s8.bf16 %v143
    %v336 = vunpack.c.h.s8.bf16 %v144
    %v337 = vunpack.c.l.s8.bf16 %v145
    %v338 = vunpack.c.l.s8.bf16 %v146
    %v339 = vunpack.c.l.s8.bf16 %v147
    %v340 = vunpack.c.l.s8.bf16 %v148
    %v341 = vunpack.c.l.s8.bf16 %v149
    %v342 = vunpack.c.l.s8.bf16 %v150
    %v343 = vunpack.c.l.s8.bf16 %v151
    %v344 = vunpack.c.l.s8.bf16 %v152
    %v345 = vunpack.c.h.s8.bf16 %v145
    %v346 = vunpack.c.h.s8.bf16 %v146
    %v347 = vunpack.c.h.s8.bf16 %v147
    %v348 = vunpack.c.h.s8.bf16 %v148
    %v349 = vunpack.c.h.s8.bf16 %v149
    %v350 = vunpack.c.h.s8.bf16 %v150
    %v351 = vunpack.c.h.s8.bf16 %v151
    %v352 = vunpack.c.h.s8.bf16 %v152
    %v353 = vunpack.c.l.s8.bf16 %v153
    %v354 = vunpack.c.l.s8.bf16 %v154
    %v355 = vunpack.c.l.s8.bf16 %v155
    %v356 = vunpack.c.l.s8.bf16 %v156
    %v357 = vunpack.c.l.s8.bf16 %v157
    %v358 = vunpack.c.l.s8.bf16 %v158
    %v359 = vunpack.c.l.s8.bf16 %v159
    %v360 = vunpack.c.l.s8.bf16 %v160
    %v361 = vunpack.c.h.s8.bf16 %v153
    %v362 = vunpack.c.h.s8.bf16 %v154
    %v363 = vunpack.c.h.s8.bf16 %v155
    %v364 = vunpack.c.h.s8.bf16 %v156
    %v365 = vunpack.c.h.s8.bf16 %v157
    %v366 = vunpack.c.h.s8.bf16 %v158
    %v367 = vunpack.c.h.s8.bf16 %v159
    %v368 = vunpack.c.h.s8.bf16 %v160
    %v369 = vunpack.c.l.s8.bf16 %v161
    %v370 = vunpack.c.l.s8.bf16 %v162
    %v371 = vunpack.c.l.s8.bf16 %v163
    %v372 = vunpack.c.l.s8.bf16 %v164
    %v373 = vunpack.c.l.s8.bf16 %v165
    %v374 = vunpack.c.l.s8.bf16 %v166
    %v375 = vunpack.c.l.s8.bf16 %v167
    %v376 = vunpack.c.l.s8.bf16 %v168
    %v377 = vunpack.c.h.s8.bf16 %v161
    %v378 = vunpack.c.h.s8.bf16 %v162
    %v379 = vunpack.c.h.s8.bf16 %v163
    %v380 = vunpack.c.h.s8.bf16 %v164
    %v381 = vunpack.c.h.s8.bf16 %v165
    %v382 = vunpack.c.h.s8.bf16 %v166
    %v383 = vunpack.c.h.s8.bf16 %v167
    %v384 = vunpack.c.h.s8.bf16 %v168
    %v385 = vunpack.c.l.s8.bf16 %v169
    %v386 = vunpack.c.l.s8.bf16 %v170
    %v387 = vunpack.c.l.s8.bf16 %v171
    %v388 = vunpack.c.l.s8.bf16 %v172
    %v389 = vunpack.c.l.s8.bf16 %v173
    %v390 = vunpack.c.l.s8.bf16 %v174
    %v391 = vunpack.c.l.s8.bf16 %v175
    %v392 = vunpack.c.l.s8.bf16 %v176
    %v393 = vunpack.c.h.s8.bf16 %v169
    %v394 = vunpack.c.h.s8.bf16 %v170
    %v395 = vunpack.c.h.s8.bf16 %v171
    %v396 = vunpack.c.h.s8.bf16 %v172
    %v397 = vunpack.c.h.s8.bf16 %v173
    %v398 = vunpack.c.h.s8.bf16 %v174
    %v399 = vunpack.c.h.s8.bf16 %v175
    %v400 = vunpack.c.h.s8.bf16 %v176
    %v401 = vunpack.c.l.s8.bf16 %v177
    %v402 = vunpack.c.l.s8.bf16 %v178
    %v403 = vunpack.c.l.s8.bf16 %v179
    %v404 = vunpack.c.l.s8.bf16 %v180
    %v405 = vunpack.c.l.s8.bf16 %v181
    %v406 = vunpack.c.l.s8.bf16 %v182
    %v407 = vunpack.c.l.s8.bf16 %v183
    %v408 = vunpack.c.l.s8.bf16 %v184
    %v409 = vunpack.c.h.s8.bf16 %v177
    %v410 = vunpack.c.h.s8.bf16 %v178
    %v411 = vunpack.c.h.s8.bf16 %v179
    %v412 = vunpack.c.h.s8.bf16 %v180
    %v413 = vunpack.c.h.s8.bf16 %v181
    %v414 = vunpack.c.h.s8.bf16 %v182
    %v415 = vunpack.c.h.s8.bf16 %v183
    %v416 = vunpack.c.h.s8.bf16 %v184
    %v417 = vunpack.c.l.s8.bf16 %v185
    %v418 = vunpack.c.l.s8.bf16 %v186
    %v419 = vunpack.c.l.s8.bf16 %v187
    %v420 = vunpack.c.l.s8.bf16 %v188
    %v421 = vunpack.c.l.s8.bf16 %v189
    %v422 = vunpack.c.l.s8.bf16 %v190
    %v423 = vunpack.c.l.s8.bf16 %v191
    %v424 = vunpack.c.l.s8.bf16 %v192
    %v425 = vunpack.c.h.s8.bf16 %v185
    %v426 = vunpack.c.h.s8.bf16 %v186
    %v427 = vunpack.c.h.s8.bf16 %v187
    %v428 = vunpack.c.h.s8.bf16 %v188
    %v429 = vunpack.c.h.s8.bf16 %v189
    %v430 = vunpack.c.h.s8.bf16 %v190
    %v431 = vunpack.c.h.s8.bf16 %v191
    %v432 = vunpack.c.h.s8.bf16 %v192
    %v433 = vunpack.c.l.s8.bf16 %v193
    %v434 = vunpack.c.l.s8.bf16 %v194
    %v435 = vunpack.c.l.s8.bf16 %v195
    %v436 = vunpack.c.l.s8.bf16 %v196
    %v437 = vunpack.c.l.s8.bf16 %v197
    %v438 = vunpack.c.l.s8.bf16 %v198
    %v439 = vunpack.c.l.s8.bf16 %v199
    %v440 = vunpack.c.l.s8.bf16 %v200
    %v441 = vunpack.c.h.s8.bf16 %v193
    %v442 = vunpack.c.h.s8.bf16 %v194
    %v443 = vunpack.c.h.s8.bf16 %v195
    %v444 = vunpack.c.h.s8.bf16 %v196
    %v445 = vunpack.c.h.s8.bf16 %v197
    %v446 = vunpack.c.h.s8.bf16 %v198
    %v447 = vunpack.c.h.s8.bf16 %v199
    %v448 = vunpack.c.h.s8.bf16 %v200
    %v449 = vunpack.c.l.s8.bf16 %v201
    %v450 = vunpack.c.l.s8.bf16 %v202
    %v451 = vunpack.c.l.s8.bf16 %v203
    %v452 = vunpack.c.l.s8.bf16 %v204
    %v453 = vunpack.c.l.s8.bf16 %v205
    %v454 = vunpack.c.l.s8.bf16 %v206
    %v455 = vunpack.c.l.s8.bf16 %v207
    %v456 = vunpack.c.l.s8.bf16 %v208
    %v457 = vunpack.c.h.s8.bf16 %v201
    %v458 = vunpack.c.h.s8.bf16 %v202
    %v459 = vunpack.c.h.s8.bf16 %v203
    %v460 = vunpack.c.h.s8.bf16 %v204
    %v461 = vunpack.c.h.s8.bf16 %v205
    %v462 = vunpack.c.h.s8.bf16 %v206
    %v463 = vunpack.c.h.s8.bf16 %v207
    %v464 = vunpack.c.h.s8.bf16 %v208
    %v467 = vunpack.c.l.b16 %v79
    %v468 = vunpack.c.h.b16 %v79
    %v469 = vunpack.c.l.b16 %v80
    %v470 = vunpack.c.h.b16 %v80
    %v471 = vpack.c.b16 %v467, %v467
    %v472 = vpack.c.b16 %v468, %v468
    %v473 = vpack.c.b16 %v469, %v469
    %v474 = vpack.c.b16 %v470, %v470
    %479 = vmatprep.subr.bf16.mxu0 %v266
    %480 = vmatpush1.bf16.msra.mxu0 %v265
    %481 = vmatprep.subr.bf16.mxu0 %v258
    %482 = vmatpush1.bf16.msra.mxu0 %v257
    %483 = vmatprep.subr.bf16.mxu0 %v250
    %484 = vmatpush1.bf16.msra.mxu0 %v249
    %485 = vmatprep.subr.bf16.mxu0 %v242
    %486 = vmatpush1.bf16.msra.mxu0 %v241
    %487 = vmatprep.subr.bf16.mxu0 %v234
    %488 = vmatpush1.bf16.msra.mxu0 %v233
    %489 = vmatprep.subr.bf16.mxu0 %v226
    %490 = vmatpush1.bf16.msra.mxu0 %v225
    %491 = vmatprep.subr.bf16.mxu0 %v218
    %492 = vmatpush1.bf16.msra.mxu0 %v217
    %493 = vmatprep.subr.bf16.mxu0 %v210
    %494 = vmatpush1.bf16.msra.mxu0 %v209
    %495 = vmatprep.subr.bf16.mxu0 %v330
    %496 = vmatpush2.bf16.msra.mxu0 %v329
    %497 = vmatprep.subr.bf16.mxu0 %v322
    %498 = vmatpush2.bf16.msra.mxu0 %v321
    %499 = vmatprep.subr.bf16.mxu0 %v314
    %500 = vmatpush2.bf16.msra.mxu0 %v313
    %501 = vmatprep.subr.bf16.mxu0 %v306
    %502 = vmatpush2.bf16.msra.mxu0 %v305
    %503 = vmatprep.subr.bf16.mxu0 %v298
    %504 = vmatpush2.bf16.msra.mxu0 %v297
    %505 = vmatprep.subr.bf16.mxu0 %v290
    %506 = vmatpush2.bf16.msra.mxu0 %v289
    %507 = vmatprep.subr.bf16.mxu0 %v282
    %508 = vmatpush2.bf16.msra.mxu0 %v281
    %509 = vmatprep.subr.bf16.mxu0 %v274
    %510 = vmatpush2.bf16.msra.mxu0 %v273
    %511 = vmatprep.mubr.bf16.mxu0 %v472
    %512 = vmatmul.mubr.bf16.gmra.mxu0 %v471
    %v513 = vpop.f32.mrf.mxu0
    %v514 = vadd.f32 0.0, %v513
    %v515 = vpop.f32.mrf.mxu0
    %v516 = vadd.f32 0.0, %v515
    %v517 = vpop.f32.mrf.mxu0
    %v518 = vpop.f32.mrf.mxu0
    %519 = vdwg.mxu0
    %520 = vmatprep.subr.bf16.mxu0 %v394
    %521 = vmatpush1.bf16.msra.mxu0 %v393
    %522 = vmatprep.subr.bf16.mxu0 %v386
    %523 = vmatpush1.bf16.msra.mxu0 %v385
    %524 = vmatprep.subr.bf16.mxu0 %v378
    %525 = vmatpush1.bf16.msra.mxu0 %v377
    %526 = vmatprep.subr.bf16.mxu0 %v370
    %527 = vmatpush1.bf16.msra.mxu0 %v369
    %528 = vmatprep.subr.bf16.mxu0 %v362
    %529 = vmatpush1.bf16.msra.mxu0 %v361
    %530 = vmatprep.subr.bf16.mxu0 %v354
    %531 = vmatpush1.bf16.msra.mxu0 %v353
    %532 = vmatprep.subr.bf16.mxu0 %v346
    %533 = vmatpush1.bf16.msra.mxu0 %v345
    %534 = vmatprep.subr.bf16.mxu0 %v338
    %535 = vmatpush1.bf16.msra.mxu0 %v337
    %536 = vmatprep.subr.bf16.mxu0 %v458
    %537 = vmatpush2.bf16.msra.mxu0 %v457
    %538 = vmatprep.subr.bf16.mxu0 %v450
    %539 = vmatpush2.bf16.msra.mxu0 %v449
    %540 = vmatprep.subr.bf16.mxu0 %v442
    %541 = vmatpush2.bf16.msra.mxu0 %v441
    %542 = vmatprep.subr.bf16.mxu0 %v434
    %543 = vmatpush2.bf16.msra.mxu0 %v433
    %544 = vmatprep.subr.bf16.mxu0 %v426
    %545 = vmatpush2.bf16.msra.mxu0 %v425
    %546 = vmatprep.subr.bf16.mxu0 %v418
    %547 = vmatpush2.bf16.msra.mxu0 %v417
    %548 = vmatprep.subr.bf16.mxu0 %v410
    %549 = vmatpush2.bf16.msra.mxu0 %v409
    %550 = vmatprep.subr.bf16.mxu0 %v402
    %551 = vmatpush2.bf16.msra.mxu0 %v401
    %552 = vmatprep.mubr.bf16.mxu0 %v474
    %553 = vmatmul.mubr.bf16.gmra.mxu0 %v473
    %v554 = vpop.f32.mrf.mxu0
    %v555 = vadd.f32 %v514, %v554
    %v556 = vpop.f32.mrf.mxu0
    %v557 = vadd.f32 %v516, %v556
    %v558 = vpop.f32.mrf.mxu0
    %v559 = vpop.f32.mrf.mxu0
    %560 = vdwg.mxu0
    %561 = vmatprep.subr.bf16.mxu0 %v268
    %562 = vmatpush1.bf16.msra.mxu0 %v267
    %563 = vmatprep.subr.bf16.mxu0 %v260
    %564 = vmatpush1.bf16.msra.mxu0 %v259
    %565 = vmatprep.subr.bf16.mxu0 %v252
    %566 = vmatpush1.bf16.msra.mxu0 %v251
    %567 = vmatprep.subr.bf16.mxu0 %v244
    %568 = vmatpush1.bf16.msra.mxu0 %v243
    %569 = vmatprep.subr.bf16.mxu0 %v236
    %570 = vmatpush1.bf16.msra.mxu0 %v235
    %571 = vmatprep.subr.bf16.mxu0 %v228
    %572 = vmatpush1.bf16.msra.mxu0 %v227
    %573 = vmatprep.subr.bf16.mxu0 %v220
    %574 = vmatpush1.bf16.msra.mxu0 %v219
    %575 = vmatprep.subr.bf16.mxu0 %v212
    %576 = vmatpush1.bf16.msra.mxu0 %v211
    %577 = vmatprep.subr.bf16.mxu0 %v332
    %578 = vmatpush2.bf16.msra.mxu0 %v331
    %579 = vmatprep.subr.bf16.mxu0 %v324
    %580 = vmatpush2.bf16.msra.mxu0 %v323
    %581 = vmatprep.subr.bf16.mxu0 %v316
    %582 = vmatpush2.bf16.msra.mxu0 %v315
    %583 = vmatprep.subr.bf16.mxu0 %v308
    %584 = vmatpush2.bf16.msra.mxu0 %v307
    %585 = vmatprep.subr.bf16.mxu0 %v300
    %586 = vmatpush2.bf16.msra.mxu0 %v299
    %587 = vmatprep.subr.bf16.mxu0 %v292
    %588 = vmatpush2.bf16.msra.mxu0 %v291
    %589 = vmatprep.subr.bf16.mxu0 %v284
    %590 = vmatpush2.bf16.msra.mxu0 %v283
    %591 = vmatprep.subr.bf16.mxu0 %v276
    %592 = vmatpush2.bf16.msra.mxu0 %v275
    %593 = vmatprep.mubr.bf16.mxu0 %v472
    %594 = vmatmul.mubr.bf16.gmra.mxu0 %v471
    %v595 = vpop.f32.mrf.mxu0
    %v596 = vadd.f32 0.0, %v595
    %v597 = vpop.f32.mrf.mxu0
    %v598 = vadd.f32 0.0, %v597
    %v599 = vpop.f32.mrf.mxu0
    %v600 = vpop.f32.mrf.mxu0
    %601 = vdwg.mxu0
    %602 = vmatprep.subr.bf16.mxu0 %v396
    %603 = vmatpush1.bf16.msra.mxu0 %v395
    %604 = vmatprep.subr.bf16.mxu0 %v388
    %605 = vmatpush1.bf16.msra.mxu0 %v387
    %606 = vmatprep.subr.bf16.mxu0 %v380
    %607 = vmatpush1.bf16.msra.mxu0 %v379
    %608 = vmatprep.subr.bf16.mxu0 %v372
    %609 = vmatpush1.bf16.msra.mxu0 %v371
    %610 = vmatprep.subr.bf16.mxu0 %v364
    %611 = vmatpush1.bf16.msra.mxu0 %v363
    %612 = vmatprep.subr.bf16.mxu0 %v356
    %613 = vmatpush1.bf16.msra.mxu0 %v355
    %614 = vmatprep.subr.bf16.mxu0 %v348
    %615 = vmatpush1.bf16.msra.mxu0 %v347
    %616 = vmatprep.subr.bf16.mxu0 %v340
    %617 = vmatpush1.bf16.msra.mxu0 %v339
    %618 = vmatprep.subr.bf16.mxu0 %v460
    %619 = vmatpush2.bf16.msra.mxu0 %v459
    %620 = vmatprep.subr.bf16.mxu0 %v452
    %621 = vmatpush2.bf16.msra.mxu0 %v451
    %622 = vmatprep.subr.bf16.mxu0 %v444
    %623 = vmatpush2.bf16.msra.mxu0 %v443
    %624 = vmatprep.subr.bf16.mxu0 %v436
    %625 = vmatpush2.bf16.msra.mxu0 %v435
    %626 = vmatprep.subr.bf16.mxu0 %v428
    %627 = vmatpush2.bf16.msra.mxu0 %v427
    %628 = vmatprep.subr.bf16.mxu0 %v420
    %629 = vmatpush2.bf16.msra.mxu0 %v419
    %630 = vmatprep.subr.bf16.mxu0 %v412
    %631 = vmatpush2.bf16.msra.mxu0 %v411
    %632 = vmatprep.subr.bf16.mxu0 %v404
    %633 = vmatpush2.bf16.msra.mxu0 %v403
    %634 = vmatprep.mubr.bf16.mxu0 %v474
    %635 = vmatmul.mubr.bf16.gmra.mxu0 %v473
    %v636 = vpop.f32.mrf.mxu0
    %v637 = vadd.f32 %v596, %v636
    %v638 = vpop.f32.mrf.mxu0
    %v639 = vadd.f32 %v598, %v638
    %v640 = vpop.f32.mrf.mxu0
    %v641 = vpop.f32.mrf.mxu0
    %642 = vdwg.mxu0
    %643 = vmatprep.subr.bf16.mxu0 %v270
    %644 = vmatpush1.bf16.msra.mxu0 %v269
    %645 = vmatprep.subr.bf16.mxu0 %v262
    %646 = vmatpush1.bf16.msra.mxu0 %v261
    %647 = vmatprep.subr.bf16.mxu0 %v254
    %648 = vmatpush1.bf16.msra.mxu0 %v253
    %649 = vmatprep.subr.bf16.mxu0 %v246
    %650 = vmatpush1.bf16.msra.mxu0 %v245
    %651 = vmatprep.subr.bf16.mxu0 %v238
    %652 = vmatpush1.bf16.msra.mxu0 %v237
    %653 = vmatprep.subr.bf16.mxu0 %v230
    %654 = vmatpush1.bf16.msra.mxu0 %v229
    %655 = vmatprep.subr.bf16.mxu0 %v222
    %656 = vmatpush1.bf16.msra.mxu0 %v221
    %657 = vmatprep.subr.bf16.mxu0 %v214
    %658 = vmatpush1.bf16.msra.mxu0 %v213
    %659 = vmatprep.subr.bf16.mxu0 %v334
    %660 = vmatpush2.bf16.msra.mxu0 %v333
    %661 = vmatprep.subr.bf16.mxu0 %v326
    %662 = vmatpush2.bf16.msra.mxu0 %v325
    %663 = vmatprep.subr.bf16.mxu0 %v318
    %664 = vmatpush2.bf16.msra.mxu0 %v317
    %665 = vmatprep.subr.bf16.mxu0 %v310
    %666 = vmatpush2.bf16.msra.mxu0 %v309
    %667 = vmatprep.subr.bf16.mxu0 %v302
    %668 = vmatpush2.bf16.msra.mxu0 %v301
    %669 = vmatprep.subr.bf16.mxu0 %v294
    %670 = vmatpush2.bf16.msra.mxu0 %v293
    %671 = vmatprep.subr.bf16.mxu0 %v286
    %672 = vmatpush2.bf16.msra.mxu0 %v285
    %673 = vmatprep.subr.bf16.mxu0 %v278
    %674 = vmatpush2.bf16.msra.mxu0 %v277
    %675 = vmatprep.mubr.bf16.mxu0 %v472
    %676 = vmatmul.mubr.bf16.gmra.mxu0 %v471
    %v677 = vpop.f32.mrf.mxu0
    %v678 = vadd.f32 0.0, %v677
    %v679 = vpop.f32.mrf.mxu0
    %v680 = vadd.f32 0.0, %v679
    %v681 = vpop.f32.mrf.mxu0
    %v682 = vpop.f32.mrf.mxu0
    %683 = vdwg.mxu0
    %684 = vmatprep.subr.bf16.mxu0 %v398
    %685 = vmatpush1.bf16.msra.mxu0 %v397
    %686 = vmatprep.subr.bf16.mxu0 %v390
    %687 = vmatpush1.bf16.msra.mxu0 %v389
    %688 = vmatprep.subr.bf16.mxu0 %v382
    %689 = vmatpush1.bf16.msra.mxu0 %v381
    %690 = vmatprep.subr.bf16.mxu0 %v374
    %691 = vmatpush1.bf16.msra.mxu0 %v373
    %692 = vmatprep.subr.bf16.mxu0 %v366
    %693 = vmatpush1.bf16.msra.mxu0 %v365
    %694 = vmatprep.subr.bf16.mxu0 %v358
    %695 = vmatpush1.bf16.msra.mxu0 %v357
    %696 = vmatprep.subr.bf16.mxu0 %v350
    %697 = vmatpush1.bf16.msra.mxu0 %v349
    %698 = vmatprep.subr.bf16.mxu0 %v342
    %699 = vmatpush1.bf16.msra.mxu0 %v341
    %700 = vmatprep.subr.bf16.mxu0 %v462
    %701 = vmatpush2.bf16.msra.mxu0 %v461
    %702 = vmatprep.subr.bf16.mxu0 %v454
    %703 = vmatpush2.bf16.msra.mxu0 %v453
    %704 = vmatprep.subr.bf16.mxu0 %v446
    %705 = vmatpush2.bf16.msra.mxu0 %v445
    %706 = vmatprep.subr.bf16.mxu0 %v438
    %707 = vmatpush2.bf16.msra.mxu0 %v437
    %708 = vmatprep.subr.bf16.mxu0 %v430
    %709 = vmatpush2.bf16.msra.mxu0 %v429
    %710 = vmatprep.subr.bf16.mxu0 %v422
    %711 = vmatpush2.bf16.msra.mxu0 %v421
    %712 = vmatprep.subr.bf16.mxu0 %v414
    %713 = vmatpush2.bf16.msra.mxu0 %v413
    %714 = vmatprep.subr.bf16.mxu0 %v406
    %715 = vmatpush2.bf16.msra.mxu0 %v405
    %716 = vmatprep.mubr.bf16.mxu0 %v474
    %717 = vmatmul.mubr.bf16.gmra.mxu0 %v473
    %v718 = vpop.f32.mrf.mxu0
    %v719 = vadd.f32 %v678, %v718
    %v720 = vpop.f32.mrf.mxu0
    %v721 = vadd.f32 %v680, %v720
    %v722 = vpop.f32.mrf.mxu0
    %v723 = vpop.f32.mrf.mxu0
    %724 = vdwg.mxu0
    %725 = vmatprep.subr.bf16.mxu0 %v272
    %726 = vmatpush1.bf16.msra.mxu0 %v271
    %727 = vmatprep.subr.bf16.mxu0 %v264
    %728 = vmatpush1.bf16.msra.mxu0 %v263
    %729 = vmatprep.subr.bf16.mxu0 %v256
    %730 = vmatpush1.bf16.msra.mxu0 %v255
    %731 = vmatprep.subr.bf16.mxu0 %v248
    %732 = vmatpush1.bf16.msra.mxu0 %v247
    %733 = vmatprep.subr.bf16.mxu0 %v240
    %734 = vmatpush1.bf16.msra.mxu0 %v239
    %735 = vmatprep.subr.bf16.mxu0 %v232
    %736 = vmatpush1.bf16.msra.mxu0 %v231
    %737 = vmatprep.subr.bf16.mxu0 %v224
    %738 = vmatpush1.bf16.msra.mxu0 %v223
    %739 = vmatprep.subr.bf16.mxu0 %v216
    %740 = vmatpush1.bf16.msra.mxu0 %v215
    %741 = vmatprep.subr.bf16.mxu0 %v336
    %742 = vmatpush2.bf16.msra.mxu0 %v335
    %743 = vmatprep.subr.bf16.mxu0 %v328
    %744 = vmatpush2.bf16.msra.mxu0 %v327
    %745 = vmatprep.subr.bf16.mxu0 %v320
    %746 = vmatpush2.bf16.msra.mxu0 %v319
    %747 = vmatprep.subr.bf16.mxu0 %v312
    %748 = vmatpush2.bf16.msra.mxu0 %v311
    %749 = vmatprep.subr.bf16.mxu0 %v304
    %750 = vmatpush2.bf16.msra.mxu0 %v303
    %751 = vmatprep.subr.bf16.mxu0 %v296
    %752 = vmatpush2.bf16.msra.mxu0 %v295
    %753 = vmatprep.subr.bf16.mxu0 %v288
    %754 = vmatpush2.bf16.msra.mxu0 %v287
    %755 = vmatprep.subr.bf16.mxu0 %v280
    %756 = vmatpush2.bf16.msra.mxu0 %v279
    %757 = vmatprep.mubr.bf16.mxu0 %v472
    %758 = vmatmul.mubr.bf16.gmra.mxu0 %v471
    %v759 = vpop.f32.mrf.mxu0
    %v760 = vadd.f32 0.0, %v759
    %v761 = vpop.f32.mrf.mxu0
    %v762 = vadd.f32 0.0, %v761
    %v763 = vpop.f32.mrf.mxu0
    %v764 = vpop.f32.mrf.mxu0
    %765 = vdwg.mxu0
    %766 = vmatprep.subr.bf16.mxu0 %v400
    %767 = vmatpush1.bf16.msra.mxu0 %v399
    %768 = vmatprep.subr.bf16.mxu0 %v392
    %769 = vmatpush1.bf16.msra.mxu0 %v391
    %770 = vmatprep.subr.bf16.mxu0 %v384
    %771 = vmatpush1.bf16.msra.mxu0 %v383
    %772 = vmatprep.subr.bf16.mxu0 %v376
    %773 = vmatpush1.bf16.msra.mxu0 %v375
    %774 = vmatprep.subr.bf16.mxu0 %v368
    %775 = vmatpush1.bf16.msra.mxu0 %v367
    %776 = vmatprep.subr.bf16.mxu0 %v360
    %777 = vmatpush1.bf16.msra.mxu0 %v359
    %778 = vmatprep.subr.bf16.mxu0 %v352
    %779 = vmatpush1.bf16.msra.mxu0 %v351
    %780 = vmatprep.subr.bf16.mxu0 %v344
    %781 = vmatpush1.bf16.msra.mxu0 %v343
    %782 = vmatprep.subr.bf16.mxu0 %v464
    %783 = vmatpush2.bf16.msra.mxu0 %v463
    %784 = vmatprep.subr.bf16.mxu0 %v456
    %785 = vmatpush2.bf16.msra.mxu0 %v455
    %786 = vmatprep.subr.bf16.mxu0 %v448
    %787 = vmatpush2.bf16.msra.mxu0 %v447
    %788 = vmatprep.subr.bf16.mxu0 %v440
    %789 = vmatpush2.bf16.msra.mxu0 %v439
    %790 = vmatprep.subr.bf16.mxu0 %v432
    %791 = vmatpush2.bf16.msra.mxu0 %v431
    %792 = vmatprep.subr.bf16.mxu0 %v424
    %793 = vmatpush2.bf16.msra.mxu0 %v423
    %794 = vmatprep.subr.bf16.mxu0 %v416
    %795 = vmatpush2.bf16.msra.mxu0 %v415
    %796 = vmatprep.subr.bf16.mxu0 %v408
    %797 = vmatpush2.bf16.msra.mxu0 %v407
    %798 = vmatprep.mubr.bf16.mxu0 %v474
    %799 = vmatmul.mubr.bf16.gmra.mxu0 %v473
    %v800 = vpop.f32.mrf.mxu0
    %v801 = vadd.f32 %v760, %v800
    %v802 = vpop.f32.mrf.mxu0
    %v803 = vadd.f32 %v762, %v802
    %v804 = vpop.f32.mrf.mxu0
    %v805 = vpop.f32.mrf.mxu0
    %806 = vdwg.mxu0
    %v807 = vrot.slane %v555, 4
    %v808 = vadd.f32 %v555, %v807
    %v809 = vrot.slane %v808, 2
    %v810 = vadd.f32 %v808, %v809
    %v811 = vrot.slane %v810, 1
    %v812 = vadd.f32 %v810, %v811
    %v813 = vrot.slane %v557, 4
    %v814 = vadd.f32 %v557, %v813
    %v815 = vrot.slane %v814, 2
    %v816 = vadd.f32 %v814, %v815
    %v817 = vrot.slane %v816, 1
    %v818 = vadd.f32 %v816, %v817
    %v819 = vrot.slane %v637, 4
    %v820 = vadd.f32 %v637, %v819
    %v821 = vrot.slane %v820, 2
    %v822 = vadd.f32 %v820, %v821
    %v823 = vrot.slane %v822, 1
    %v824 = vadd.f32 %v822, %v823
    %v825 = vrot.slane %v639, 4
    %v826 = vadd.f32 %v639, %v825
    %v827 = vrot.slane %v826, 2
    %v828 = vadd.f32 %v826, %v827
    %v829 = vrot.slane %v828, 1
    %v830 = vadd.f32 %v828, %v829
    %v831 = vrot.slane %v719, 4
    %v832 = vadd.f32 %v719, %v831
    %v833 = vrot.slane %v832, 2
    %v834 = vadd.f32 %v832, %v833
    %v835 = vrot.slane %v834, 1
    %v836 = vadd.f32 %v834, %v835
    %v837 = vrot.slane %v721, 4
    %v838 = vadd.f32 %v721, %v837
    %v839 = vrot.slane %v838, 2
    %v840 = vadd.f32 %v838, %v839
    %v841 = vrot.slane %v840, 1
    %v842 = vadd.f32 %v840, %v841
    %v843 = vrot.slane %v801, 4
    %v844 = vadd.f32 %v801, %v843
    %v845 = vrot.slane %v844, 2
    %v846 = vadd.f32 %v844, %v845
    %v847 = vrot.slane %v846, 1
    %v848 = vadd.f32 %v846, %v847
    %v849 = vrot.slane %v803, 4
    %v850 = vadd.f32 %v803, %v849
    %v851 = vrot.slane %v850, 2
    %v852 = vadd.f32 %v850, %v851
    %v853 = vrot.slane %v852, 1
    %v854 = vadd.f32 %v852, %v853
    %v855 = vrcp.pop 8.0
    %v856 = vmul.f32 %v812, %v855
    %v857 = vmul.f32 %v818, %v855
    %v858 = vmul.f32 %v824, %v855
    %v859 = vmul.f32 %v830, %v855
    %v860 = vmul.f32 %v836, %v855
    %v861 = vmul.f32 %v842, %v855
    %v862 = vmul.f32 %v848, %v855
    %v863 = vmul.f32 %v854, %v855
    %v864 = vmul.f32 %v555, %v555
    %v865 = vmul.f32 %v557, %v557
    %v866 = vmul.f32 %v637, %v637
    %v867 = vmul.f32 %v639, %v639
    %v868 = vmul.f32 %v719, %v719
    %v869 = vmul.f32 %v721, %v721
    %v870 = vmul.f32 %v801, %v801
    %v871 = vmul.f32 %v803, %v803
    %v872 = vrot.slane %v864, 4
    %v873 = vadd.f32 %v864, %v872
    %v874 = vrot.slane %v873, 2
    %v875 = vadd.f32 %v873, %v874
    %v876 = vrot.slane %v875, 1
    %v877 = vadd.f32 %v875, %v876
    %v878 = vrot.slane %v865, 4
    %v879 = vadd.f32 %v865, %v878
    %v880 = vrot.slane %v879, 2
    %v881 = vadd.f32 %v879, %v880
    %v882 = vrot.slane %v881, 1
    %v883 = vadd.f32 %v881, %v882
    %v884 = vrot.slane %v866, 4
    %v885 = vadd.f32 %v866, %v884
    %v886 = vrot.slane %v885, 2
    %v887 = vadd.f32 %v885, %v886
    %v888 = vrot.slane %v887, 1
    %v889 = vadd.f32 %v887, %v888
    %v890 = vrot.slane %v867, 4
    %v891 = vadd.f32 %v867, %v890
    %v892 = vrot.slane %v891, 2
    %v893 = vadd.f32 %v891, %v892
    %v894 = vrot.slane %v893, 1
    %v895 = vadd.f32 %v893, %v894
    %v896 = vrot.slane %v868, 4
    %v897 = vadd.f32 %v868, %v896
    %v898 = vrot.slane %v897, 2
    %v899 = vadd.f32 %v897, %v898
    %v900 = vrot.slane %v899, 1
    %v901 = vadd.f32 %v899, %v900
    %v902 = vrot.slane %v869, 4
    %v903 = vadd.f32 %v869, %v902
    %v904 = vrot.slane %v903, 2
    %v905 = vadd.f32 %v903, %v904
    %v906 = vrot.slane %v905, 1
    %v907 = vadd.f32 %v905, %v906
    %v908 = vrot.slane %v870, 4
    %v909 = vadd.f32 %v870, %v908
    %v910 = vrot.slane %v909, 2
    %v911 = vadd.f32 %v909, %v910
    %v912 = vrot.slane %v911, 1
    %v913 = vadd.f32 %v911, %v912
    %v914 = vrot.slane %v871, 4
    %v915 = vadd.f32 %v871, %v914
    %v916 = vrot.slane %v915, 2
    %v917 = vadd.f32 %v915, %v916
    %v918 = vrot.slane %v917, 1
    %v919 = vadd.f32 %v917, %v918
    %v920 = vmul.f32 %v877, %v855
    %v921 = vmul.f32 %v883, %v855
    %v922 = vmul.f32 %v889, %v855
    %v923 = vmul.f32 %v895, %v855
    %v924 = vmul.f32 %v901, %v855
    %v925 = vmul.f32 %v907, %v855
    %v926 = vmul.f32 %v913, %v855
    %v927 = vmul.f32 %v919, %v855
    %v928 = vmul.f32 %v856, %v856
    %v929 = vmul.f32 %v857, %v857
    %v930 = vmul.f32 %v858, %v858
    %v931 = vmul.f32 %v859, %v859
    %v932 = vmul.f32 %v860, %v860
    %v933 = vmul.f32 %v861, %v861
    %v934 = vmul.f32 %v862, %v862
    %v935 = vmul.f32 %v863, %v863
    %v936 = vsub.f32 %v920, %v928
    %v937 = vsub.f32 %v921, %v929
    %v938 = vsub.f32 %v922, %v930
    %v939 = vsub.f32 %v923, %v931
    %v940 = vsub.f32 %v924, %v932
    %v941 = vsub.f32 %v925, %v933
    %v942 = vsub.f32 %v926, %v934
    %v943 = vsub.f32 %v927, %v935
    %v944 = vmax.f32 %v936, 0.0
    %v945 = vmax.f32 %v937, 0.0
    %v946 = vmax.f32 %v938, 0.0
    %v947 = vmax.f32 %v939, 0.0
    %v948 = vmax.f32 %v940, 0.0
    %v949 = vmax.f32 %v941, 0.0
    %v950 = vmax.f32 %v942, 0.0
    %v951 = vmax.f32 %v943, 0.0
    %v952 = vmul.f32 %v68, %v70
    %v953 = vmul.f32 %v70, %v70
    %v962 = vcombine.low %v944, %v945
    %v963 = vcombine.low %v946, %v947
    %v964 = vcombine.low %v948, %v949
    %v965 = vcombine.low %v950, %v951
    %v967 = vunpack.c.l.s4 1966171168
    %v968 = vunpack.c.0.s8 %v967
    %v969 = vlaneseq
    %v970 = vshrl.u32 %v969, 7
    %v971 = vsub.s32 %v968, %v970
    %v972 = vrot.slane %v962, %v971
    %v974 = vunpack.c.l.s4 1966171168
    %v975 = vunpack.c.0.s8 %v974
    %v976 = vlaneseq
    %v977 = vshrl.u32 %v976, 7
    %v978 = vsub.s32 %v975, %v977
    %v979 = vrot.slane %v963, %v978
    %v981 = vunpack.c.l.s4 1966171168
    %v982 = vunpack.c.0.s8 %v981
    %v983 = vlaneseq
    %v984 = vshrl.u32 %v983, 7
    %v985 = vsub.s32 %v982, %v984
    %v986 = vrot.slane %v964, %v985
    %v988 = vunpack.c.l.s4 1966171168
    %v989 = vunpack.c.0.s8 %v988
    %v990 = vlaneseq
    %v991 = vshrl.u32 %v990, 7
    %v992 = vsub.s32 %v989, %v991
    %v993 = vrot.slane %v965, %v992
    %v994 = vcombine.low %v972, %v979
    %v995 = vcombine.low %v986, %v993
    %v997 = vunpack.c.l.s4 1966171168
    %v998 = vunpack.c.0.s8 %v997
    %v999 = vlaneseq
    %v1000 = vshrl.u32 %v999, 7
    %v1001 = vsub.s32 %v998, %v1000
    %v1002 = vrot.slane %v994, %v1001
    %v1004 = vunpack.c.l.s4 1966171168
    %v1005 = vunpack.c.0.s8 %v1004
    %v1006 = vlaneseq
    %v1007 = vshrl.u32 %v1006, 7
    %v1008 = vsub.s32 %v1005, %v1007
    %v1009 = vrot.slane %v995, %v1008
    %v1010 = vcombine.low %v1002, %v1009
    %v1012 = vmul.f32 %v953, %v1010
    %v1013 = vadd.f32 %v1012, 1e-05
    %v1014 = vrsqrt.pop %v1013
    %v1015 = vmul.f32 %v952, %v1014
    %v1017 = vlaneseq
    %v1018 = vshrl.u32 %v1017, 7
    %v1019 = vsub.s32 0, %v1018
    %v1020 = vrot.slane %v1015, %v1019
    %v1021 = vlaneseq
    %v1022 = vshrl.u32 %v1021, 7
    %v1023 = vsub.s32 1, %v1022
    %v1024 = vrot.slane %v1015, %v1023
    %v1025 = vlaneseq
    %v1026 = vshrl.u32 %v1025, 7
    %v1027 = vsub.s32 2, %v1026
    %v1028 = vrot.slane %v1015, %v1027
    %v1029 = vlaneseq
    %v1030 = vshrl.u32 %v1029, 7
    %v1031 = vsub.s32 3, %v1030
    %v1032 = vrot.slane %v1015, %v1031
    %v1033 = vlaneseq
    %v1034 = vshrl.u32 %v1033, 7
    %v1035 = vsub.s32 4, %v1034
    %v1036 = vrot.slane %v1015, %v1035
    %v1037 = vlaneseq
    %v1038 = vshrl.u32 %v1037, 7
    %v1039 = vsub.s32 5, %v1038
    %v1040 = vrot.slane %v1015, %v1039
    %v1041 = vlaneseq
    %v1042 = vshrl.u32 %v1041, 7
    %v1043 = vsub.s32 6, %v1042
    %v1044 = vrot.slane %v1015, %v1043
    %v1045 = vlaneseq
    %v1046 = vshrl.u32 %v1045, 7
    %v1047 = vsub.s32 7, %v1046
    %v1048 = vrot.slane %v1015, %v1047
    %v1057 = vmul.f32 %v856, %v1020
    %v1058 = vmul.f32 %v857, %v1024
    %v1059 = vmul.f32 %v858, %v1028
    %v1060 = vmul.f32 %v859, %v1032
    %v1061 = vmul.f32 %v860, %v1036
    %v1062 = vmul.f32 %v861, %v1040
    %v1063 = vmul.f32 %v862, %v1044
    %v1064 = vmul.f32 %v863, %v1048
    %v1073 = vcombine.low %v1057, %v1058
    %v1074 = vcombine.low %v1059, %v1060
    %v1075 = vcombine.low %v1061, %v1062
    %v1076 = vcombine.low %v1063, %v1064
    %v1078 = vunpack.c.l.s4 1966171168
    %v1079 = vunpack.c.0.s8 %v1078
    %v1080 = vlaneseq
    %v1081 = vshrl.u32 %v1080, 7
    %v1082 = vsub.s32 %v1079, %v1081
    %v1083 = vrot.slane %v1073, %v1082
    %v1085 = vunpack.c.l.s4 1966171168
    %v1086 = vunpack.c.0.s8 %v1085
    %v1087 = vlaneseq
    %v1088 = vshrl.u32 %v1087, 7
    %v1089 = vsub.s32 %v1086, %v1088
    %v1090 = vrot.slane %v1074, %v1089
    %v1092 = vunpack.c.l.s4 1966171168
    %v1093 = vunpack.c.0.s8 %v1092
    %v1094 = vlaneseq
    %v1095 = vshrl.u32 %v1094, 7
    %v1096 = vsub.s32 %v1093, %v1095
    %v1097 = vrot.slane %v1075, %v1096
    %v1099 = vunpack.c.l.s4 1966171168
    %v1100 = vunpack.c.0.s8 %v1099
    %v1101 = vlaneseq
    %v1102 = vshrl.u32 %v1101, 7
    %v1103 = vsub.s32 %v1100, %v1102
    %v1104 = vrot.slane %v1076, %v1103
    %v1105 = vcombine.low %v1083, %v1090
    %v1106 = vcombine.low %v1097, %v1104
    %v1108 = vunpack.c.l.s4 1966171168
    %v1109 = vunpack.c.0.s8 %v1108
    %v1110 = vlaneseq
    %v1111 = vshrl.u32 %v1110, 7
    %v1112 = vsub.s32 %v1109, %v1111
    %v1113 = vrot.slane %v1105, %v1112
    %v1115 = vunpack.c.l.s4 1966171168
    %v1116 = vunpack.c.0.s8 %v1115
    %v1117 = vlaneseq
    %v1118 = vshrl.u32 %v1117, 7
    %v1119 = vsub.s32 %v1116, %v1118
    %v1120 = vrot.slane %v1106, %v1119
    %v1121 = vcombine.low %v1113, %v1120
    %v1123 = vsub.f32 %v69, %v1121
    %v1124 = vmul.f32 %v555, %v1020
    %v1125 = vmul.f32 %v557, %v1024
    %v1126 = vmul.f32 %v637, %v1028
    %v1127 = vmul.f32 %v639, %v1032
    %v1128 = vmul.f32 %v719, %v1036
    %v1129 = vmul.f32 %v721, %v1040
    %v1130 = vmul.f32 %v801, %v1044
    %v1131 = vmul.f32 %v803, %v1048
    %v1133 = vlaneseq
    %v1134 = vshrl.u32 %v1133, 7
    %v1135 = vsub.s32 0, %v1134
    %v1136 = vrot.slane %v1123, %v1135
    %v1137 = vlaneseq
    %v1138 = vshrl.u32 %v1137, 7
    %v1139 = vsub.s32 1, %v1138
    %v1140 = vrot.slane %v1123, %v1139
    %v1141 = vlaneseq
    %v1142 = vshrl.u32 %v1141, 7
    %v1143 = vsub.s32 2, %v1142
    %v1144 = vrot.slane %v1123, %v1143
    %v1145 = vlaneseq
    %v1146 = vshrl.u32 %v1145, 7
    %v1147 = vsub.s32 3, %v1146
    %v1148 = vrot.slane %v1123, %v1147
    %v1149 = vlaneseq
    %v1150 = vshrl.u32 %v1149, 7
    %v1151 = vsub.s32 4, %v1150
    %v1152 = vrot.slane %v1123, %v1151
    %v1153 = vlaneseq
    %v1154 = vshrl.u32 %v1153, 7
    %v1155 = vsub.s32 5, %v1154
    %v1156 = vrot.slane %v1123, %v1155
    %v1157 = vlaneseq
    %v1158 = vshrl.u32 %v1157, 7
    %v1159 = vsub.s32 6, %v1158
    %v1160 = vrot.slane %v1123, %v1159
    %v1161 = vlaneseq
    %v1162 = vshrl.u32 %v1161, 7
    %v1163 = vsub.s32 7, %v1162
    %v1164 = vrot.slane %v1123, %v1163
    %v1173 = vadd.f32 %v1124, %v1136
    %v1174 = vadd.f32 %v1125, %v1140
    %v1175 = vadd.f32 %v1126, %v1144
    %v1176 = vadd.f32 %v1127, %v1148
    %v1177 = vadd.f32 %v1128, %v1152
    %v1178 = vadd.f32 %v1129, %v1156
    %v1179 = vadd.f32 %v1130, %v1160
    %v1180 = vadd.f32 %v1131, %v1164
    %v1181 = vmax.f32 %v1173, 0.0
    %v1182 = vmax.f32 %v1174, 0.0
    %v1183 = vmax.f32 %v1175, 0.0
    %v1184 = vmax.f32 %v1176, 0.0
    %v1185 = vmax.f32 %v1177, 0.0
    %v1186 = vmax.f32 %v1178, 0.0
    %v1187 = vmax.f32 %v1179, 0.0
    %v1188 = vmax.f32 %v1180, 0.0
    %v1189 = vpack.c.bf16 %v1181, %v1181
    %v1190 = vpack.c.bf16 %v1182, %v1182
    %v1191 = vpack.c.bf16 %v1183, %v1183
    %v1192 = vpack.c.bf16 %v1184, %v1184
    %v1193 = vpack.c.bf16 %v1185, %v1185
    %v1194 = vpack.c.bf16 %v1186, %v1186
    %v1195 = vpack.c.bf16 %v1187, %v1187
    %v1196 = vpack.c.bf16 %v1188, %v1188
    %v1197 = vld [vmem:[#allocation6] sm:$0xff]
    %v1198 = vld [vmem:[#allocation6 + $0x8] sm:$0xff]
    %v1199 = vld [vmem:[#allocation6 + $0x10] sm:$0xff]
    %v1200 = vld [vmem:[#allocation6 + $0x18] sm:$0xff]
    %v1201 = vld [vmem:[#allocation6 + $0x50] sm:$0xff]
    %v1202 = vld [vmem:[#allocation6 + $0x58] sm:$0xff]
    %v1203 = vld [vmem:[#allocation6 + $0x60] sm:$0xff]
    %v1204 = vld [vmem:[#allocation6 + $0x68] sm:$0xff]
    %v1205 = vld [vmem:[#allocation6 + $0xa0] sm:$0xff]
    %v1206 = vld [vmem:[#allocation6 + $0xa8] sm:$0xff]
    %v1207 = vld [vmem:[#allocation6 + $0xb0] sm:$0xff]
    %v1208 = vld [vmem:[#allocation6 + $0xb8] sm:$0xff]
    %v1209 = vld [vmem:[#allocation6 + $0xf0] sm:$0xff]
    %v1210 = vld [vmem:[#allocation6 + $0xf8] sm:$0xff]
    %v1211 = vld [vmem:[#allocation6 + $0x100] sm:$0xff]
    %v1212 = vld [vmem:[#allocation6 + $0x108] sm:$0xff]
    %v1213 = vld [vmem:[#allocation6 + $0x140] sm:$0xff]
    %v1214 = vld [vmem:[#allocation6 + $0x148] sm:$0xff]
    %v1215 = vld [vmem:[#allocation6 + $0x150] sm:$0xff]
    %v1216 = vld [vmem:[#allocation6 + $0x158] sm:$0xff]
    %v1217 = vld [vmem:[#allocation6 + $0x190] sm:$0xff]
    %v1218 = vld [vmem:[#allocation6 + $0x198] sm:$0xff]
    %v1219 = vld [vmem:[#allocation6 + $0x1a0] sm:$0xff]
    %v1220 = vld [vmem:[#allocation6 + $0x1a8] sm:$0xff]
    %v1221 = vld [vmem:[#allocation6 + $0x1e0] sm:$0xff]
    %v1222 = vld [vmem:[#allocation6 + $0x1e8] sm:$0xff]
    %v1223 = vld [vmem:[#allocation6 + $0x1f0] sm:$0xff]
    %v1224 = vld [vmem:[#allocation6 + $0x1f8] sm:$0xff]
    %v1225 = vld [vmem:[#allocation6 + $0x230] sm:$0xff]
    %v1226 = vld [vmem:[#allocation6 + $0x238] sm:$0xff]
    %v1227 = vld [vmem:[#allocation6 + $0x240] sm:$0xff]
    %v1228 = vld [vmem:[#allocation6 + $0x248] sm:$0xff]
    %v1229 = vld [vmem:[#allocation6 + $0x280] sm:$0xff]
    %v1230 = vld [vmem:[#allocation6 + $0x288] sm:$0xff]
    %v1231 = vld [vmem:[#allocation6 + $0x290] sm:$0xff]
    %v1232 = vld [vmem:[#allocation6 + $0x298] sm:$0xff]
    %v1233 = vld [vmem:[#allocation6 + $0x2d0] sm:$0xff]
    %v1234 = vld [vmem:[#allocation6 + $0x2d8] sm:$0xff]
    %v1235 = vld [vmem:[#allocation6 + $0x2e0] sm:$0xff]
    %v1236 = vld [vmem:[#allocation6 + $0x2e8] sm:$0xff]
    %v1237 = vld [vmem:[#allocation6 + $0x320] sm:$0xff]
    %v1238 = vld [vmem:[#allocation6 + $0x328] sm:$0xff]
    %v1239 = vld [vmem:[#allocation6 + $0x330] sm:$0xff]
    %v1240 = vld [vmem:[#allocation6 + $0x338] sm:$0xff]
    %v1241 = vld [vmem:[#allocation6 + $0x370] sm:$0xff]
    %v1242 = vld [vmem:[#allocation6 + $0x378] sm:$0xff]
    %v1243 = vld [vmem:[#allocation6 + $0x380] sm:$0xff]
    %v1244 = vld [vmem:[#allocation6 + $0x388] sm:$0xff]
    %v1245 = vld [vmem:[#allocation6 + $0x3c0] sm:$0xff]
    %v1246 = vld [vmem:[#allocation6 + $0x3c8] sm:$0xff]
    %v1247 = vld [vmem:[#allocation6 + $0x3d0] sm:$0xff]
    %v1248 = vld [vmem:[#allocation6 + $0x3d8] sm:$0xff]
    %v1249 = vld [vmem:[#allocation6 + $0x410] sm:$0xff]
    %v1250 = vld [vmem:[#allocation6 + $0x418] sm:$0xff]
    %v1251 = vld [vmem:[#allocation6 + $0x420] sm:$0xff]
    %v1252 = vld [vmem:[#allocation6 + $0x428] sm:$0xff]
    %v1253 = vld [vmem:[#allocation6 + $0x460] sm:$0xff]
    %v1254 = vld [vmem:[#allocation6 + $0x468] sm:$0xff]
    %v1255 = vld [vmem:[#allocation6 + $0x470] sm:$0xff]
    %v1256 = vld [vmem:[#allocation6 + $0x478] sm:$0xff]
    %v1257 = vld [vmem:[#allocation6 + $0x4b0] sm:$0xff]
    %v1258 = vld [vmem:[#allocation6 + $0x4b8] sm:$0xff]
    %v1259 = vld [vmem:[#allocation6 + $0x4c0] sm:$0xff]
    %v1260 = vld [vmem:[#allocation6 + $0x4c8] sm:$0xff]
    %v1261 = vunpack.c.l.s8.bf16 %v1197
    %v1262 = vunpack.c.l.s8.bf16 %v1198
    %v1263 = vunpack.c.l.s8.bf16 %v1199
    %v1264 = vunpack.c.l.s8.bf16 %v1200
    %v1265 = vunpack.c.h.s8.bf16 %v1197
    %v1266 = vunpack.c.h.s8.bf16 %v1198
    %v1267 = vunpack.c.h.s8.bf16 %v1199
    %v1268 = vunpack.c.h.s8.bf16 %v1200
    %v1269 = vunpack.c.l.s8.bf16 %v1201
    %v1270 = vunpack.c.l.s8.bf16 %v1202
    %v1271 = vunpack.c.l.s8.bf16 %v1203
    %v1272 = vunpack.c.l.s8.bf16 %v1204
    %v1273 = vunpack.c.h.s8.bf16 %v1201
    %v1274 = vunpack.c.h.s8.bf16 %v1202
    %v1275 = vunpack.c.h.s8.bf16 %v1203
    %v1276 = vunpack.c.h.s8.bf16 %v1204
    %v1277 = vunpack.c.l.s8.bf16 %v1205
    %v1278 = vunpack.c.l.s8.bf16 %v1206
    %v1279 = vunpack.c.l.s8.bf16 %v1207
    %v1280 = vunpack.c.l.s8.bf16 %v1208
    %v1281 = vunpack.c.h.s8.bf16 %v1205
    %v1282 = vunpack.c.h.s8.bf16 %v1206
    %v1283 = vunpack.c.h.s8.bf16 %v1207
    %v1284 = vunpack.c.h.s8.bf16 %v1208
    %v1285 = vunpack.c.l.s8.bf16 %v1209
    %v1286 = vunpack.c.l.s8.bf16 %v1210
    %v1287 = vunpack.c.l.s8.bf16 %v1211
    %v1288 = vunpack.c.l.s8.bf16 %v1212
    %v1289 = vunpack.c.h.s8.bf16 %v1209
    %v1290 = vunpack.c.h.s8.bf16 %v1210
    %v1291 = vunpack.c.h.s8.bf16 %v1211
    %v1292 = vunpack.c.h.s8.bf16 %v1212
    %v1293 = vunpack.c.l.s8.bf16 %v1213
    %v1294 = vunpack.c.l.s8.bf16 %v1214
    %v1295 = vunpack.c.l.s8.bf16 %v1215
    %v1296 = vunpack.c.l.s8.bf16 %v1216
    %v1297 = vunpack.c.h.s8.bf16 %v1213
    %v1298 = vunpack.c.h.s8.bf16 %v1214
    %v1299 = vunpack.c.h.s8.bf16 %v1215
    %v1300 = vunpack.c.h.s8.bf16 %v1216
    %v1301 = vunpack.c.l.s8.bf16 %v1217
    %v1302 = vunpack.c.l.s8.bf16 %v1218
    %v1303 = vunpack.c.l.s8.bf16 %v1219
    %v1304 = vunpack.c.l.s8.bf16 %v1220
    %v1305 = vunpack.c.h.s8.bf16 %v1217
    %v1306 = vunpack.c.h.s8.bf16 %v1218
    %v1307 = vunpack.c.h.s8.bf16 %v1219
    %v1308 = vunpack.c.h.s8.bf16 %v1220
    %v1309 = vunpack.c.l.s8.bf16 %v1221
    %v1310 = vunpack.c.l.s8.bf16 %v1222
    %v1311 = vunpack.c.l.s8.bf16 %v1223
    %v1312 = vunpack.c.l.s8.bf16 %v1224
    %v1313 = vunpack.c.h.s8.bf16 %v1221
    %v1314 = vunpack.c.h.s8.bf16 %v1222
    %v1315 = vunpack.c.h.s8.bf16 %v1223
    %v1316 = vunpack.c.h.s8.bf16 %v1224
    %v1317 = vunpack.c.l.s8.bf16 %v1225
    %v1318 = vunpack.c.l.s8.bf16 %v1226
    %v1319 = vunpack.c.l.s8.bf16 %v1227
    %v1320 = vunpack.c.l.s8.bf16 %v1228
    %v1321 = vunpack.c.h.s8.bf16 %v1225
    %v1322 = vunpack.c.h.s8.bf16 %v1226
    %v1323 = vunpack.c.h.s8.bf16 %v1227
    %v1324 = vunpack.c.h.s8.bf16 %v1228
    %v1325 = vunpack.c.l.s8.bf16 %v1229
    %v1326 = vunpack.c.l.s8.bf16 %v1230
    %v1327 = vunpack.c.l.s8.bf16 %v1231
    %v1328 = vunpack.c.l.s8.bf16 %v1232
    %v1329 = vunpack.c.h.s8.bf16 %v1229
    %v1330 = vunpack.c.h.s8.bf16 %v1230
    %v1331 = vunpack.c.h.s8.bf16 %v1231
    %v1332 = vunpack.c.h.s8.bf16 %v1232
    %v1333 = vunpack.c.l.s8.bf16 %v1233
    %v1334 = vunpack.c.l.s8.bf16 %v1234
    %v1335 = vunpack.c.l.s8.bf16 %v1235
    %v1336 = vunpack.c.l.s8.bf16 %v1236
    %v1337 = vunpack.c.h.s8.bf16 %v1233
    %v1338 = vunpack.c.h.s8.bf16 %v1234
    %v1339 = vunpack.c.h.s8.bf16 %v1235
    %v1340 = vunpack.c.h.s8.bf16 %v1236
    %v1341 = vunpack.c.l.s8.bf16 %v1237
    %v1342 = vunpack.c.l.s8.bf16 %v1238
    %v1343 = vunpack.c.l.s8.bf16 %v1239
    %v1344 = vunpack.c.l.s8.bf16 %v1240
    %v1345 = vunpack.c.h.s8.bf16 %v1237
    %v1346 = vunpack.c.h.s8.bf16 %v1238
    %v1347 = vunpack.c.h.s8.bf16 %v1239
    %v1348 = vunpack.c.h.s8.bf16 %v1240
    %v1349 = vunpack.c.l.s8.bf16 %v1241
    %v1350 = vunpack.c.l.s8.bf16 %v1242
    %v1351 = vunpack.c.l.s8.bf16 %v1243
    %v1352 = vunpack.c.l.s8.bf16 %v1244
    %v1353 = vunpack.c.h.s8.bf16 %v1241
    %v1354 = vunpack.c.h.s8.bf16 %v1242
    %v1355 = vunpack.c.h.s8.bf16 %v1243
    %v1356 = vunpack.c.h.s8.bf16 %v1244
    %v1357 = vunpack.c.l.s8.bf16 %v1245
    %v1358 = vunpack.c.l.s8.bf16 %v1246
    %v1359 = vunpack.c.l.s8.bf16 %v1247
    %v1360 = vunpack.c.l.s8.bf16 %v1248
    %v1361 = vunpack.c.h.s8.bf16 %v1245
    %v1362 = vunpack.c.h.s8.bf16 %v1246
    %v1363 = vunpack.c.h.s8.bf16 %v1247
    %v1364 = vunpack.c.h.s8.bf16 %v1248
    %v1365 = vunpack.c.l.s8.bf16 %v1249
    %v1366 = vunpack.c.l.s8.bf16 %v1250
    %v1367 = vunpack.c.l.s8.bf16 %v1251
    %v1368 = vunpack.c.l.s8.bf16 %v1252
    %v1369 = vunpack.c.h.s8.bf16 %v1249
    %v1370 = vunpack.c.h.s8.bf16 %v1250
    %v1371 = vunpack.c.h.s8.bf16 %v1251
    %v1372 = vunpack.c.h.s8.bf16 %v1252
    %v1373 = vunpack.c.l.s8.bf16 %v1253
    %v1374 = vunpack.c.l.s8.bf16 %v1254
    %v1375 = vunpack.c.l.s8.bf16 %v1255
    %v1376 = vunpack.c.l.s8.bf16 %v1256
    %v1377 = vunpack.c.h.s8.bf16 %v1253
    %v1378 = vunpack.c.h.s8.bf16 %v1254
    %v1379 = vunpack.c.h.s8.bf16 %v1255
    %v1380 = vunpack.c.h.s8.bf16 %v1256
    %v1381 = vunpack.c.l.s8.bf16 %v1257
    %v1382 = vunpack.c.l.s8.bf16 %v1258
    %v1383 = vunpack.c.l.s8.bf16 %v1259
    %v1384 = vunpack.c.l.s8.bf16 %v1260
    %v1385 = vunpack.c.h.s8.bf16 %v1257
    %v1386 = vunpack.c.h.s8.bf16 %v1258
    %v1387 = vunpack.c.h.s8.bf16 %v1259
    %v1388 = vunpack.c.h.s8.bf16 %v1260
    %v1389 = vld [vmem:[#allocation6 + $0x20] sm:$0xff]
    %v1390 = vld [vmem:[#allocation6 + $0x28] sm:$0xff]
    %v1391 = vld [vmem:[#allocation6 + $0x30] sm:$0xff]
    %v1392 = vld [vmem:[#allocation6 + $0x38] sm:$0xff]
    %v1393 = vld [vmem:[#allocation6 + $0x70] sm:$0xff]
    %v1394 = vld [vmem:[#allocation6 + $0x78] sm:$0xff]
    %v1395 = vld [vmem:[#allocation6 + $0x80] sm:$0xff]
    %v1396 = vld [vmem:[#allocation6 + $0x88] sm:$0xff]
    %v1397 = vld [vmem:[#allocation6 + $0xc0] sm:$0xff]
    %v1398 = vld [vmem:[#allocation6 + $0xc8] sm:$0xff]
    %v1399 = vld [vmem:[#allocation6 + $0xd0] sm:$0xff]
    %v1400 = vld [vmem:[#allocation6 + $0xd8] sm:$0xff]
    %v1401 = vld [vmem:[#allocation6 + $0x110] sm:$0xff]
    %v1402 = vld [vmem:[#allocation6 + $0x118] sm:$0xff]
    %v1403 = vld [vmem:[#allocation6 + $0x120] sm:$0xff]
    %v1404 = vld [vmem:[#allocation6 + $0x128] sm:$0xff]
    %v1405 = vld [vmem:[#allocation6 + $0x160] sm:$0xff]
    %v1406 = vld [vmem:[#allocation6 + $0x168] sm:$0xff]
    %v1407 = vld [vmem:[#allocation6 + $0x170] sm:$0xff]
    %v1408 = vld [vmem:[#allocation6 + $0x178] sm:$0xff]
    %v1409 = vld [vmem:[#allocation6 + $0x1b0] sm:$0xff]
    %v1410 = vld [vmem:[#allocation6 + $0x1b8] sm:$0xff]
    %v1411 = vld [vmem:[#allocation6 + $0x1c0] sm:$0xff]
    %v1412 = vld [vmem:[#allocation6 + $0x1c8] sm:$0xff]
    %v1413 = vld [vmem:[#allocation6 + $0x200] sm:$0xff]
    %v1414 = vld [vmem:[#allocation6 + $0x208] sm:$0xff]
    %v1415 = vld [vmem:[#allocation6 + $0x210] sm:$0xff]
    %v1416 = vld [vmem:[#allocation6 + $0x218] sm:$0xff]
    %v1417 = vld [vmem:[#allocation6 + $0x250] sm:$0xff]
    %v1418 = vld [vmem:[#allocation6 + $0x258] sm:$0xff]
    %v1419 = vld [vmem:[#allocation6 + $0x260] sm:$0xff]
    %v1420 = vld [vmem:[#allocation6 + $0x268] sm:$0xff]
    %v1421 = vld [vmem:[#allocation6 + $0x2a0] sm:$0xff]
    %v1422 = vld [vmem:[#allocation6 + $0x2a8] sm:$0xff]
    %v1423 = vld [vmem:[#allocation6 + $0x2b0] sm:$0xff]
    %v1424 = vld [vmem:[#allocation6 + $0x2b8] sm:$0xff]
    %v1425 = vld [vmem:[#allocation6 + $0x2f0] sm:$0xff]
    %v1426 = vld [vmem:[#allocation6 + $0x2f8] sm:$0xff]
    %v1427 = vld [vmem:[#allocation6 + $0x300] sm:$0xff]
    %v1428 = vld [vmem:[#allocation6 + $0x308] sm:$0xff]
    %v1429 = vld [vmem:[#allocation6 + $0x340] sm:$0xff]
    %v1430 = vld [vmem:[#allocation6 + $0x348] sm:$0xff]
    %v1431 = vld [vmem:[#allocation6 + $0x350] sm:$0xff]
    %v1432 = vld [vmem:[#allocation6 + $0x358] sm:$0xff]
    %v1433 = vld [vmem:[#allocation6 + $0x390] sm:$0xff]
    %v1434 = vld [vmem:[#allocation6 + $0x398] sm:$0xff]
    %v1435 = vld [vmem:[#allocation6 + $0x3a0] sm:$0xff]
    %v1436 = vld [vmem:[#allocation6 + $0x3a8] sm:$0xff]
    %v1437 = vld [vmem:[#allocation6 + $0x3e0] sm:$0xff]
    %v1438 = vld [vmem:[#allocation6 + $0x3e8] sm:$0xff]
    %v1439 = vld [vmem:[#allocation6 + $0x3f0] sm:$0xff]
    %v1440 = vld [vmem:[#allocation6 + $0x3f8] sm:$0xff]
    %v1441 = vld [vmem:[#allocation6 + $0x430] sm:$0xff]
    %v1442 = vld [vmem:[#allocation6 + $0x438] sm:$0xff]
    %v1443 = vld [vmem:[#allocation6 + $0x440] sm:$0xff]
    %v1444 = vld [vmem:[#allocation6 + $0x448] sm:$0xff]
    %v1445 = vld [vmem:[#allocation6 + $0x480] sm:$0xff]
    %v1446 = vld [vmem:[#allocation6 + $0x488] sm:$0xff]
    %v1447 = vld [vmem:[#allocation6 + $0x490] sm:$0xff]
    %v1448 = vld [vmem:[#allocation6 + $0x498] sm:$0xff]
    %v1449 = vld [vmem:[#allocation6 + $0x4d0] sm:$0xff]
    %v1450 = vld [vmem:[#allocation6 + $0x4d8] sm:$0xff]
    %v1451 = vld [vmem:[#allocation6 + $0x4e0] sm:$0xff]
    %v1452 = vld [vmem:[#allocation6 + $0x4e8] sm:$0xff]
    %v1453 = vunpack.c.l.s8.bf16 %v1389
    %v1454 = vunpack.c.l.s8.bf16 %v1390
    %v1455 = vunpack.c.l.s8.bf16 %v1391
    %v1456 = vunpack.c.l.s8.bf16 %v1392
    %v1457 = vunpack.c.h.s8.bf16 %v1389
    %v1458 = vunpack.c.h.s8.bf16 %v1390
    %v1459 = vunpack.c.h.s8.bf16 %v1391
    %v1460 = vunpack.c.h.s8.bf16 %v1392
    %v1461 = vunpack.c.l.s8.bf16 %v1393
    %v1462 = vunpack.c.l.s8.bf16 %v1394
    %v1463 = vunpack.c.l.s8.bf16 %v1395
    %v1464 = vunpack.c.l.s8.bf16 %v1396
    %v1465 = vunpack.c.h.s8.bf16 %v1393
    %v1466 = vunpack.c.h.s8.bf16 %v1394
    %v1467 = vunpack.c.h.s8.bf16 %v1395
    %v1468 = vunpack.c.h.s8.bf16 %v1396
    %v1469 = vunpack.c.l.s8.bf16 %v1397
    %v1470 = vunpack.c.l.s8.bf16 %v1398
    %v1471 = vunpack.c.l.s8.bf16 %v1399
    %v1472 = vunpack.c.l.s8.bf16 %v1400
    %v1473 = vunpack.c.h.s8.bf16 %v1397
    %v1474 = vunpack.c.h.s8.bf16 %v1398
    %v1475 = vunpack.c.h.s8.bf16 %v1399
    %v1476 = vunpack.c.h.s8.bf16 %v1400
    %v1477 = vunpack.c.l.s8.bf16 %v1401
    %v1478 = vunpack.c.l.s8.bf16 %v1402
    %v1479 = vunpack.c.l.s8.bf16 %v1403
    %v1480 = vunpack.c.l.s8.bf16 %v1404
    %v1481 = vunpack.c.h.s8.bf16 %v1401
    %v1482 = vunpack.c.h.s8.bf16 %v1402
    %v1483 = vunpack.c.h.s8.bf16 %v1403
    %v1484 = vunpack.c.h.s8.bf16 %v1404
    %v1485 = vunpack.c.l.s8.bf16 %v1405
    %v1486 = vunpack.c.l.s8.bf16 %v1406
    %v1487 = vunpack.c.l.s8.bf16 %v1407
    %v1488 = vunpack.c.l.s8.bf16 %v1408
    %v1489 = vunpack.c.h.s8.bf16 %v1405
    %v1490 = vunpack.c.h.s8.bf16 %v1406
    %v1491 = vunpack.c.h.s8.bf16 %v1407
    %v1492 = vunpack.c.h.s8.bf16 %v1408
    %v1493 = vunpack.c.l.s8.bf16 %v1409
    %v1494 = vunpack.c.l.s8.bf16 %v1410
    %v1495 = vunpack.c.l.s8.bf16 %v1411
    %v1496 = vunpack.c.l.s8.bf16 %v1412
    %v1497 = vunpack.c.h.s8.bf16 %v1409
    %v1498 = vunpack.c.h.s8.bf16 %v1410
    %v1499 = vunpack.c.h.s8.bf16 %v1411
    %v1500 = vunpack.c.h.s8.bf16 %v1412
    %v1501 = vunpack.c.l.s8.bf16 %v1413
    %v1502 = vunpack.c.l.s8.bf16 %v1414
    %v1503 = vunpack.c.l.s8.bf16 %v1415
    %v1504 = vunpack.c.l.s8.bf16 %v1416
    %v1505 = vunpack.c.h.s8.bf16 %v1413
    %v1506 = vunpack.c.h.s8.bf16 %v1414
    %v1507 = vunpack.c.h.s8.bf16 %v1415
    %v1508 = vunpack.c.h.s8.bf16 %v1416
    %v1509 = vunpack.c.l.s8.bf16 %v1417
    %v1510 = vunpack.c.l.s8.bf16 %v1418
    %v1511 = vunpack.c.l.s8.bf16 %v1419
    %v1512 = vunpack.c.l.s8.bf16 %v1420
    %v1513 = vunpack.c.h.s8.bf16 %v1417
    %v1514 = vunpack.c.h.s8.bf16 %v1418
    %v1515 = vunpack.c.h.s8.bf16 %v1419
    %v1516 = vunpack.c.h.s8.bf16 %v1420
    %v1517 = vunpack.c.l.s8.bf16 %v1421
    %v1518 = vunpack.c.l.s8.bf16 %v1422
    %v1519 = vunpack.c.l.s8.bf16 %v1423
    %v1520 = vunpack.c.l.s8.bf16 %v1424
    %v1521 = vunpack.c.h.s8.bf16 %v1421
    %v1522 = vunpack.c.h.s8.bf16 %v1422
    %v1523 = vunpack.c.h.s8.bf16 %v1423
    %v1524 = vunpack.c.h.s8.bf16 %v1424
    %v1525 = vunpack.c.l.s8.bf16 %v1425
    %v1526 = vunpack.c.l.s8.bf16 %v1426
    %v1527 = vunpack.c.l.s8.bf16 %v1427
    %v1528 = vunpack.c.l.s8.bf16 %v1428
    %v1529 = vunpack.c.h.s8.bf16 %v1425
    %v1530 = vunpack.c.h.s8.bf16 %v1426
    %v1531 = vunpack.c.h.s8.bf16 %v1427
    %v1532 = vunpack.c.h.s8.bf16 %v1428
    %v1533 = vunpack.c.l.s8.bf16 %v1429
    %v1534 = vunpack.c.l.s8.bf16 %v1430
    %v1535 = vunpack.c.l.s8.bf16 %v1431
    %v1536 = vunpack.c.l.s8.bf16 %v1432
    %v1537 = vunpack.c.h.s8.bf16 %v1429
    %v1538 = vunpack.c.h.s8.bf16 %v1430
    %v1539 = vunpack.c.h.s8.bf16 %v1431
    %v1540 = vunpack.c.h.s8.bf16 %v1432
    %v1541 = vunpack.c.l.s8.bf16 %v1433
    %v1542 = vunpack.c.l.s8.bf16 %v1434
    %v1543 = vunpack.c.l.s8.bf16 %v1435
    %v1544 = vunpack.c.l.s8.bf16 %v1436
    %v1545 = vunpack.c.h.s8.bf16 %v1433
    %v1546 = vunpack.c.h.s8.bf16 %v1434
    %v1547 = vunpack.c.h.s8.bf16 %v1435
    %v1548 = vunpack.c.h.s8.bf16 %v1436
    %v1549 = vunpack.c.l.s8.bf16 %v1437
    %v1550 = vunpack.c.l.s8.bf16 %v1438
    %v1551 = vunpack.c.l.s8.bf16 %v1439
    %v1552 = vunpack.c.l.s8.bf16 %v1440
    %v1553 = vunpack.c.h.s8.bf16 %v1437
    %v1554 = vunpack.c.h.s8.bf16 %v1438
    %v1555 = vunpack.c.h.s8.bf16 %v1439
    %v1556 = vunpack.c.h.s8.bf16 %v1440
    %v1557 = vunpack.c.l.s8.bf16 %v1441
    %v1558 = vunpack.c.l.s8.bf16 %v1442
    %v1559 = vunpack.c.l.s8.bf16 %v1443
    %v1560 = vunpack.c.l.s8.bf16 %v1444
    %v1561 = vunpack.c.h.s8.bf16 %v1441
    %v1562 = vunpack.c.h.s8.bf16 %v1442
    %v1563 = vunpack.c.h.s8.bf16 %v1443
    %v1564 = vunpack.c.h.s8.bf16 %v1444
    %v1565 = vunpack.c.l.s8.bf16 %v1445
    %v1566 = vunpack.c.l.s8.bf16 %v1446
    %v1567 = vunpack.c.l.s8.bf16 %v1447
    %v1568 = vunpack.c.l.s8.bf16 %v1448
    %v1569 = vunpack.c.h.s8.bf16 %v1445
    %v1570 = vunpack.c.h.s8.bf16 %v1446
    %v1571 = vunpack.c.h.s8.bf16 %v1447
    %v1572 = vunpack.c.h.s8.bf16 %v1448
    %v1573 = vunpack.c.l.s8.bf16 %v1449
    %v1574 = vunpack.c.l.s8.bf16 %v1450
    %v1575 = vunpack.c.l.s8.bf16 %v1451
    %v1576 = vunpack.c.l.s8.bf16 %v1452
    %v1577 = vunpack.c.h.s8.bf16 %v1449
    %v1578 = vunpack.c.h.s8.bf16 %v1450
    %v1579 = vunpack.c.h.s8.bf16 %v1451
    %v1580 = vunpack.c.h.s8.bf16 %v1452
    %1581 = vmatprep.subr.bf16.mxu0 %v1482
    %1582 = vmatpush1.bf16.msra.mxu0 %v1481
    %1583 = vmatprep.subr.bf16.mxu0 %v1478
    %1584 = vmatpush1.bf16.msra.mxu0 %v1477
    %1585 = vmatprep.subr.bf16.mxu0 %v1474
    %1586 = vmatpush1.bf16.msra.mxu0 %v1473
    %1587 = vmatprep.subr.bf16.mxu0 %v1470
    %1588 = vmatpush1.bf16.msra.mxu0 %v1469
    %1589 = vmatprep.subr.bf16.mxu0 %v1466
    %1590 = vmatpush1.bf16.msra.mxu0 %v1465
    %1591 = vmatprep.subr.bf16.mxu0 %v1462
    %1592 = vmatpush1.bf16.msra.mxu0 %v1461
    %1593 = vmatprep.subr.bf16.mxu0 %v1458
    %1594 = vmatpush1.bf16.msra.mxu0 %v1457
    %1595 = vmatprep.subr.bf16.mxu0 %v1454
    %1596 = vmatpush1.bf16.msra.mxu0 %v1453
    %1597 = vmatprep.subr.bf16.mxu0 %v1514
    %1598 = vmatpush2.bf16.msra.mxu0 %v1513
    %1599 = vmatprep.subr.bf16.mxu0 %v1510
    %1600 = vmatpush2.bf16.msra.mxu0 %v1509
    %1601 = vmatprep.subr.bf16.mxu0 %v1506
    %1602 = vmatpush2.bf16.msra.mxu0 %v1505
    %1603 = vmatprep.subr.bf16.mxu0 %v1502
    %1604 = vmatpush2.bf16.msra.mxu0 %v1501
    %1605 = vmatprep.subr.bf16.mxu0 %v1498
    %1606 = vmatpush2.bf16.msra.mxu0 %v1497
    %1607 = vmatprep.subr.bf16.mxu0 %v1494
    %1608 = vmatpush2.bf16.msra.mxu0 %v1493
    %1609 = vmatprep.subr.bf16.mxu0 %v1490
    %1610 = vmatpush2.bf16.msra.mxu0 %v1489
    %1611 = vmatprep.subr.bf16.mxu0 %v1486
    %1612 = vmatpush2.bf16.msra.mxu0 %v1485
    %1613 = vmatprep.mubr.bf16.mxu0 %v1194
    %1614 = vmatmul.mubr.bf16.gmra.mxu0 %v1193
    %v1615 = vpop.f32.mrf.mxu0
    %v1616 = vadd.f32 0.0, %v1615
    %v1617 = vpop.f32.mrf.mxu0
    %v1618 = vadd.f32 0.0, %v1617
    %v1619 = vpop.f32.mrf.mxu0
    %v1620 = vpop.f32.mrf.mxu0
    %1621 = vdwg.mxu0
    %1622 = vmatprep.subr.bf16.mxu0 %v1546
    %1623 = vmatpush1.bf16.msra.mxu0 %v1545
    %1624 = vmatprep.subr.bf16.mxu0 %v1542
    %1625 = vmatpush1.bf16.msra.mxu0 %v1541
    %1626 = vmatprep.subr.bf16.mxu0 %v1538
    %1627 = vmatpush1.bf16.msra.mxu0 %v1537
    %1628 = vmatprep.subr.bf16.mxu0 %v1534
    %1629 = vmatpush1.bf16.msra.mxu0 %v1533
    %1630 = vmatprep.subr.bf16.mxu0 %v1530
    %1631 = vmatpush1.bf16.msra.mxu0 %v1529
    %1632 = vmatprep.subr.bf16.mxu0 %v1526
    %1633 = vmatpush1.bf16.msra.mxu0 %v1525
    %1634 = vmatprep.subr.bf16.mxu0 %v1522
    %1635 = vmatpush1.bf16.msra.mxu0 %v1521
    %1636 = vmatprep.subr.bf16.mxu0 %v1518
    %1637 = vmatpush1.bf16.msra.mxu0 %v1517
    %1638 = vmatprep.subr.bf16.mxu0 %v1578
    %1639 = vmatpush2.bf16.msra.mxu0 %v1577
    %1640 = vmatprep.subr.bf16.mxu0 %v1574
    %1641 = vmatpush2.bf16.msra.mxu0 %v1573
    %1642 = vmatprep.subr.bf16.mxu0 %v1570
    %1643 = vmatpush2.bf16.msra.mxu0 %v1569
    %1644 = vmatprep.subr.bf16.mxu0 %v1566
    %1645 = vmatpush2.bf16.msra.mxu0 %v1565
    %1646 = vmatprep.subr.bf16.mxu0 %v1562
    %1647 = vmatpush2.bf16.msra.mxu0 %v1561
    %1648 = vmatprep.subr.bf16.mxu0 %v1558
    %1649 = vmatpush2.bf16.msra.mxu0 %v1557
    %1650 = vmatprep.subr.bf16.mxu0 %v1554
    %1651 = vmatpush2.bf16.msra.mxu0 %v1553
    %1652 = vmatprep.subr.bf16.mxu0 %v1550
    %1653 = vmatpush2.bf16.msra.mxu0 %v1549
    %1654 = vmatprep.mubr.bf16.mxu0 %v1196
    %1655 = vmatmul.mubr.bf16.gmra.mxu0 %v1195
    %v1656 = vpop.f32.mrf.mxu0
    %v1657 = vadd.f32 %v1616, %v1656
    %v1658 = vpop.f32.mrf.mxu0
    %v1659 = vadd.f32 %v1618, %v1658
    %v1660 = vpop.f32.mrf.mxu0
    %v1661 = vpop.f32.mrf.mxu0
    %1662 = vdwg.mxu0
    %1663 = vmatprep.subr.bf16.mxu0 %v1484
    %1664 = vmatpush1.bf16.msra.mxu0 %v1483
    %1665 = vmatprep.subr.bf16.mxu0 %v1480
    %1666 = vmatpush1.bf16.msra.mxu0 %v1479
    %1667 = vmatprep.subr.bf16.mxu0 %v1476
    %1668 = vmatpush1.bf16.msra.mxu0 %v1475
    %1669 = vmatprep.subr.bf16.mxu0 %v1472
    %1670 = vmatpush1.bf16.msra.mxu0 %v1471
    %1671 = vmatprep.subr.bf16.mxu0 %v1468
    %1672 = vmatpush1.bf16.msra.mxu0 %v1467
    %1673 = vmatprep.subr.bf16.mxu0 %v1464
    %1674 = vmatpush1.bf16.msra.mxu0 %v1463
    %1675 = vmatprep.subr.bf16.mxu0 %v1460
    %1676 = vmatpush1.bf16.msra.mxu0 %v1459
    %1677 = vmatprep.subr.bf16.mxu0 %v1456
    %1678 = vmatpush1.bf16.msra.mxu0 %v1455
    %1679 = vmatprep.subr.bf16.mxu0 %v1516
    %1680 = vmatpush2.bf16.msra.mxu0 %v1515
    %1681 = vmatprep.subr.bf16.mxu0 %v1512
    %1682 = vmatpush2.bf16.msra.mxu0 %v1511
    %1683 = vmatprep.subr.bf16.mxu0 %v1508
    %1684 = vmatpush2.bf16.msra.mxu0 %v1507
    %1685 = vmatprep.subr.bf16.mxu0 %v1504
    %1686 = vmatpush2.bf16.msra.mxu0 %v1503
    %1687 = vmatprep.subr.bf16.mxu0 %v1500
    %1688 = vmatpush2.bf16.msra.mxu0 %v1499
    %1689 = vmatprep.subr.bf16.mxu0 %v1496
    %1690 = vmatpush2.bf16.msra.mxu0 %v1495
    %1691 = vmatprep.subr.bf16.mxu0 %v1492
    %1692 = vmatpush2.bf16.msra.mxu0 %v1491
    %1693 = vmatprep.subr.bf16.mxu0 %v1488
    %1694 = vmatpush2.bf16.msra.mxu0 %v1487
    %1695 = vmatprep.mubr.bf16.mxu0 %v1194
    %1696 = vmatmul.mubr.bf16.gmra.mxu0 %v1193
    %v1697 = vpop.f32.mrf.mxu0
    %v1698 = vadd.f32 0.0, %v1697
    %v1699 = vpop.f32.mrf.mxu0
    %v1700 = vadd.f32 0.0, %v1699
    %v1701 = vpop.f32.mrf.mxu0
    %v1702 = vpop.f32.mrf.mxu0
    %1703 = vdwg.mxu0
    %1704 = vmatprep.subr.bf16.mxu0 %v1548
    %1705 = vmatpush1.bf16.msra.mxu0 %v1547
    %1706 = vmatprep.subr.bf16.mxu0 %v1544
    %1707 = vmatpush1.bf16.msra.mxu0 %v1543
    %1708 = vmatprep.subr.bf16.mxu0 %v1540
    %1709 = vmatpush1.bf16.msra.mxu0 %v1539
    %1710 = vmatprep.subr.bf16.mxu0 %v1536
    %1711 = vmatpush1.bf16.msra.mxu0 %v1535
    %1712 = vmatprep.subr.bf16.mxu0 %v1532
    %1713 = vmatpush1.bf16.msra.mxu0 %v1531
    %1714 = vmatprep.subr.bf16.mxu0 %v1528
    %1715 = vmatpush1.bf16.msra.mxu0 %v1527
    %1716 = vmatprep.subr.bf16.mxu0 %v1524
    %1717 = vmatpush1.bf16.msra.mxu0 %v1523
    %1718 = vmatprep.subr.bf16.mxu0 %v1520
    %1719 = vmatpush1.bf16.msra.mxu0 %v1519
    %1720 = vmatprep.subr.bf16.mxu0 %v1580
    %1721 = vmatpush2.bf16.msra.mxu0 %v1579
    %1722 = vmatprep.subr.bf16.mxu0 %v1576
    %1723 = vmatpush2.bf16.msra.mxu0 %v1575
    %1724 = vmatprep.subr.bf16.mxu0 %v1572
    %1725 = vmatpush2.bf16.msra.mxu0 %v1571
    %1726 = vmatprep.subr.bf16.mxu0 %v1568
    %1727 = vmatpush2.bf16.msra.mxu0 %v1567
    %1728 = vmatprep.subr.bf16.mxu0 %v1564
    %1729 = vmatpush2.bf16.msra.mxu0 %v1563
    %1730 = vmatprep.subr.bf16.mxu0 %v1560
    %1731 = vmatpush2.bf16.msra.mxu0 %v1559
    %1732 = vmatprep.subr.bf16.mxu0 %v1556
    %1733 = vmatpush2.bf16.msra.mxu0 %v1555
    %1734 = vmatprep.subr.bf16.mxu0 %v1552
    %1735 = vmatpush2.bf16.msra.mxu0 %v1551
    %1736 = vmatprep.mubr.bf16.mxu0 %v1196
    %1737 = vmatmul.mubr.bf16.gmra.mxu0 %v1195
    %v1738 = vpop.f32.mrf.mxu0
    %v1739 = vadd.f32 %v1698, %v1738
    %v1740 = vpop.f32.mrf.mxu0
    %v1741 = vadd.f32 %v1700, %v1740
    %v1742 = vpop.f32.mrf.mxu0
    %v1743 = vpop.f32.mrf.mxu0
    %1744 = vdwg.mxu0
    %1745 = vmatprep.subr.bf16.mxu0 %v1290
    %1746 = vmatpush1.bf16.msra.mxu0 %v1289
    %1747 = vmatprep.subr.bf16.mxu0 %v1286
    %1748 = vmatpush1.bf16.msra.mxu0 %v1285
    %1749 = vmatprep.subr.bf16.mxu0 %v1282
    %1750 = vmatpush1.bf16.msra.mxu0 %v1281
    %1751 = vmatprep.subr.bf16.mxu0 %v1278
    %1752 = vmatpush1.bf16.msra.mxu0 %v1277
    %1753 = vmatprep.subr.bf16.mxu0 %v1274
    %1754 = vmatpush1.bf16.msra.mxu0 %v1273
    %1755 = vmatprep.subr.bf16.mxu0 %v1270
    %1756 = vmatpush1.bf16.msra.mxu0 %v1269
    %1757 = vmatprep.subr.bf16.mxu0 %v1266
    %1758 = vmatpush1.bf16.msra.mxu0 %v1265
    %1759 = vmatprep.subr.bf16.mxu0 %v1262
    %1760 = vmatpush1.bf16.msra.mxu0 %v1261
    %1761 = vmatprep.subr.bf16.mxu0 %v1322
    %1762 = vmatpush2.bf16.msra.mxu0 %v1321
    %1763 = vmatprep.subr.bf16.mxu0 %v1318
    %1764 = vmatpush2.bf16.msra.mxu0 %v1317
    %1765 = vmatprep.subr.bf16.mxu0 %v1314
    %1766 = vmatpush2.bf16.msra.mxu0 %v1313
    %1767 = vmatprep.subr.bf16.mxu0 %v1310
    %1768 = vmatpush2.bf16.msra.mxu0 %v1309
    %1769 = vmatprep.subr.bf16.mxu0 %v1306
    %1770 = vmatpush2.bf16.msra.mxu0 %v1305
    %1771 = vmatprep.subr.bf16.mxu0 %v1302
    %1772 = vmatpush2.bf16.msra.mxu0 %v1301
    %1773 = vmatprep.subr.bf16.mxu0 %v1298
    %1774 = vmatpush2.bf16.msra.mxu0 %v1297
    %1775 = vmatprep.subr.bf16.mxu0 %v1294
    %1776 = vmatpush2.bf16.msra.mxu0 %v1293
    %1777 = vmatprep.mubr.bf16.mxu0 %v1190
    %1778 = vmatmul.mubr.bf16.gmra.mxu0 %v1189
    %v1779 = vpop.f32.mrf.mxu0
    %v1780 = vadd.f32 %v1657, %v1779
    %v1781 = vpop.f32.mrf.mxu0
    %v1782 = vadd.f32 %v1659, %v1781
    %v1783 = vpop.f32.mrf.mxu0
    %v1784 = vpop.f32.mrf.mxu0
    %1785 = vdwg.mxu0
    %1786 = vmatprep.subr.bf16.mxu0 %v1354
    %1787 = vmatpush1.bf16.msra.mxu0 %v1353
    %1788 = vmatprep.subr.bf16.mxu0 %v1350
    %1789 = vmatpush1.bf16.msra.mxu0 %v1349
    %1790 = vmatprep.subr.bf16.mxu0 %v1346
    %1791 = vmatpush1.bf16.msra.mxu0 %v1345
    %1792 = vmatprep.subr.bf16.mxu0 %v1342
    %1793 = vmatpush1.bf16.msra.mxu0 %v1341
    %1794 = vmatprep.subr.bf16.mxu0 %v1338
    %1795 = vmatpush1.bf16.msra.mxu0 %v1337
    %1796 = vmatprep.subr.bf16.mxu0 %v1334
    %1797 = vmatpush1.bf16.msra.mxu0 %v1333
    %1798 = vmatprep.subr.bf16.mxu0 %v1330
    %1799 = vmatpush1.bf16.msra.mxu0 %v1329
    %1800 = vmatprep.subr.bf16.mxu0 %v1326
    %1801 = vmatpush1.bf16.msra.mxu0 %v1325
    %1802 = vmatprep.subr.bf16.mxu0 %v1386
    %1803 = vmatpush2.bf16.msra.mxu0 %v1385
    %1804 = vmatprep.subr.bf16.mxu0 %v1382
    %1805 = vmatpush2.bf16.msra.mxu0 %v1381
    %1806 = vmatprep.subr.bf16.mxu0 %v1378
    %1807 = vmatpush2.bf16.msra.mxu0 %v1377
    %1808 = vmatprep.subr.bf16.mxu0 %v1374
    %1809 = vmatpush2.bf16.msra.mxu0 %v1373
    %1810 = vmatprep.subr.bf16.mxu0 %v1370
    %1811 = vmatpush2.bf16.msra.mxu0 %v1369
    %1812 = vmatprep.subr.bf16.mxu0 %v1366
    %1813 = vmatpush2.bf16.msra.mxu0 %v1365
    %1814 = vmatprep.subr.bf16.mxu0 %v1362
    %1815 = vmatpush2.bf16.msra.mxu0 %v1361
    %1816 = vmatprep.subr.bf16.mxu0 %v1358
    %1817 = vmatpush2.bf16.msra.mxu0 %v1357
    %1818 = vmatprep.mubr.bf16.mxu0 %v1192
    %1819 = vmatmul.mubr.bf16.gmra.mxu0 %v1191
    %v1820 = vpop.f32.mrf.mxu0
    %v1821 = vadd.f32 %v1780, %v1820
    %v1822 = vpop.f32.mrf.mxu0
    %v1823 = vadd.f32 %v1782, %v1822
    %v1824 = vpop.f32.mrf.mxu0
    %v1825 = vpop.f32.mrf.mxu0
    %1826 = vdwg.mxu0
    %1827 = vmatprep.subr.bf16.mxu0 %v1292
    %1828 = vmatpush1.bf16.msra.mxu0 %v1291
    %1829 = vmatprep.subr.bf16.mxu0 %v1288
    %1830 = vmatpush1.bf16.msra.mxu0 %v1287
    %1831 = vmatprep.subr.bf16.mxu0 %v1284
    %1832 = vmatpush1.bf16.msra.mxu0 %v1283
    %1833 = vmatprep.subr.bf16.mxu0 %v1280
    %1834 = vmatpush1.bf16.msra.mxu0 %v1279
    %1835 = vmatprep.subr.bf16.mxu0 %v1276
    %1836 = vmatpush1.bf16.msra.mxu0 %v1275
    %1837 = vmatprep.subr.bf16.mxu0 %v1272
    %1838 = vmatpush1.bf16.msra.mxu0 %v1271
    %1839 = vmatprep.subr.bf16.mxu0 %v1268
    %1840 = vmatpush1.bf16.msra.mxu0 %v1267
    %1841 = vmatprep.subr.bf16.mxu0 %v1264
    %1842 = vmatpush1.bf16.msra.mxu0 %v1263
    %1843 = vmatprep.subr.bf16.mxu0 %v1324
    %1844 = vmatpush2.bf16.msra.mxu0 %v1323
    %1845 = vmatprep.subr.bf16.mxu0 %v1320
    %1846 = vmatpush2.bf16.msra.mxu0 %v1319
    %1847 = vmatprep.subr.bf16.mxu0 %v1316
    %1848 = vmatpush2.bf16.msra.mxu0 %v1315
    %1849 = vmatprep.subr.bf16.mxu0 %v1312
    %1850 = vmatpush2.bf16.msra.mxu0 %v1311
    %1851 = vmatprep.subr.bf16.mxu0 %v1308
    %1852 = vmatpush2.bf16.msra.mxu0 %v1307
    %1853 = vmatprep.subr.bf16.mxu0 %v1304
    %1854 = vmatpush2.bf16.msra.mxu0 %v1303
    %1855 = vmatprep.subr.bf16.mxu0 %v1300
    %1856 = vmatpush2.bf16.msra.mxu0 %v1299
    %1857 = vmatprep.subr.bf16.mxu0 %v1296
    %1858 = vmatpush2.bf16.msra.mxu0 %v1295
    %1859 = vmatprep.mubr.bf16.mxu0 %v1190
    %1860 = vmatmul.mubr.bf16.gmra.mxu0 %v1189
    %v1861 = vpop.f32.mrf.mxu0
    %v1862 = vadd.f32 %v1739, %v1861
    %v1863 = vpop.f32.mrf.mxu0
    %v1864 = vadd.f32 %v1741, %v1863
    %v1865 = vpop.f32.mrf.mxu0
    %v1866 = vpop.f32.mrf.mxu0
    %1867 = vdwg.mxu0
    %1868 = vmatprep.subr.bf16.mxu0 %v1356
    %1869 = vmatpush1.bf16.msra.mxu0 %v1355
    %1870 = vmatprep.subr.bf16.mxu0 %v1352
    %1871 = vmatpush1.bf16.msra.mxu0 %v1351
    %1872 = vmatprep.subr.bf16.mxu0 %v1348
    %1873 = vmatpush1.bf16.msra.mxu0 %v1347
    %1874 = vmatprep.subr.bf16.mxu0 %v1344
    %1875 = vmatpush1.bf16.msra.mxu0 %v1343
    %1876 = vmatprep.subr.bf16.mxu0 %v1340
    %1877 = vmatpush1.bf16.msra.mxu0 %v1339
    %1878 = vmatprep.subr.bf16.mxu0 %v1336
    %1879 = vmatpush1.bf16.msra.mxu0 %v1335
    %1880 = vmatprep.subr.bf16.mxu0 %v1332
    %1881 = vmatpush1.bf16.msra.mxu0 %v1331
    %1882 = vmatprep.subr.bf16.mxu0 %v1328
    %1883 = vmatpush1.bf16.msra.mxu0 %v1327
    %1884 = vmatprep.subr.bf16.mxu0 %v1388
    %1885 = vmatpush2.bf16.msra.mxu0 %v1387
    %1886 = vmatprep.subr.bf16.mxu0 %v1384
    %1887 = vmatpush2.bf16.msra.mxu0 %v1383
    %1888 = vmatprep.subr.bf16.mxu0 %v1380
    %1889 = vmatpush2.bf16.msra.mxu0 %v1379
    %1890 = vmatprep.subr.bf16.mxu0 %v1376
    %1891 = vmatpush2.bf16.msra.mxu0 %v1375
    %1892 = vmatprep.subr.bf16.mxu0 %v1372
    %1893 = vmatpush2.bf16.msra.mxu0 %v1371
    %1894 = vmatprep.subr.bf16.mxu0 %v1368
    %1895 = vmatpush2.bf16.msra.mxu0 %v1367
    %1896 = vmatprep.subr.bf16.mxu0 %v1364
    %1897 = vmatpush2.bf16.msra.mxu0 %v1363
    %1898 = vmatprep.subr.bf16.mxu0 %v1360
    %1899 = vmatpush2.bf16.msra.mxu0 %v1359
    %1900 = vmatprep.mubr.bf16.mxu0 %v1192
    %1901 = vmatmul.mubr.bf16.gmra.mxu0 %v1191
    %v1902 = vpop.f32.mrf.mxu0
    %v1903 = vadd.f32 %v1862, %v1902
    %v1904 = vpop.f32.mrf.mxu0
    %v1905 = vadd.f32 %v1864, %v1904
    %v1906 = vpop.f32.mrf.mxu0
    %v1907 = vpop.f32.mrf.mxu0
    %1908 = vdwg.mxu0
    %v1909 = vrot.slane %v1821, 4
    %v1910 = vadd.f32 %v1821, %v1909
    %v1911 = vrot.slane %v1910, 2
    %v1912 = vadd.f32 %v1910, %v1911
    %v1913 = vrot.slane %v1912, 1
    %v1914 = vadd.f32 %v1912, %v1913
    %v1915 = vrot.slane %v1823, 4
    %v1916 = vadd.f32 %v1823, %v1915
    %v1917 = vrot.slane %v1916, 2
    %v1918 = vadd.f32 %v1916, %v1917
    %v1919 = vrot.slane %v1918, 1
    %v1920 = vadd.f32 %v1918, %v1919
    %v1921 = vrot.slane %v1903, 4
    %v1922 = vadd.f32 %v1903, %v1921
    %v1923 = vrot.slane %v1922, 2
    %v1924 = vadd.f32 %v1922, %v1923
    %v1925 = vrot.slane %v1924, 1
    %v1926 = vadd.f32 %v1924, %v1925
    %v1927 = vrot.slane %v1905, 4
    %v1928 = vadd.f32 %v1905, %v1927
    %v1929 = vrot.slane %v1928, 2
    %v1930 = vadd.f32 %v1928, %v1929
    %v1931 = vrot.slane %v1930, 1
    %v1932 = vadd.f32 %v1930, %v1931
    %v1933 = vmul.f32 %v1914, %v855
    %v1934 = vmul.f32 %v1920, %v855
    %v1935 = vmul.f32 %v1926, %v855
    %v1936 = vmul.f32 %v1932, %v855
    %v1937 = vmul.f32 %v1821, %v1821
    %v1938 = vmul.f32 %v1823, %v1823
    %v1939 = vmul.f32 %v1903, %v1903
    %v1940 = vmul.f32 %v1905, %v1905
    %v1941 = vrot.slane %v1937, 4
    %v1942 = vadd.f32 %v1937, %v1941
    %v1943 = vrot.slane %v1942, 2
    %v1944 = vadd.f32 %v1942, %v1943
    %v1945 = vrot.slane %v1944, 1
    %v1946 = vadd.f32 %v1944, %v1945
    %v1947 = vrot.slane %v1938, 4
    %v1948 = vadd.f32 %v1938, %v1947
    %v1949 = vrot.slane %v1948, 2
    %v1950 = vadd.f32 %v1948, %v1949
    %v1951 = vrot.slane %v1950, 1
    %v1952 = vadd.f32 %v1950, %v1951
    %v1953 = vrot.slane %v1939, 4
    %v1954 = vadd.f32 %v1939, %v1953
    %v1955 = vrot.slane %v1954, 2
    %v1956 = vadd.f32 %v1954, %v1955
    %v1957 = vrot.slane %v1956, 1
    %v1958 = vadd.f32 %v1956, %v1957
    %v1959 = vrot.slane %v1940, 4
    %v1960 = vadd.f32 %v1940, %v1959
    %v1961 = vrot.slane %v1960, 2
    %v1962 = vadd.f32 %v1960, %v1961
    %v1963 = vrot.slane %v1962, 1
    %v1964 = vadd.f32 %v1962, %v1963
    %v1965 = vmul.f32 %v1946, %v855
    %v1966 = vmul.f32 %v1952, %v855
    %v1967 = vmul.f32 %v1958, %v855
    %v1968 = vmul.f32 %v1964, %v855
    %v1969 = vmul.f32 %v1933, %v1933
    %v1970 = vmul.f32 %v1934, %v1934
    %v1971 = vmul.f32 %v1935, %v1935
    %v1972 = vmul.f32 %v1936, %v1936
    %v1973 = vsub.f32 %v1965, %v1969
    %v1974 = vsub.f32 %v1966, %v1970
    %v1975 = vsub.f32 %v1967, %v1971
    %v1976 = vsub.f32 %v1968, %v1972
    %v1977 = vmax.f32 %v1973, 0.0
    %v1978 = vmax.f32 %v1974, 0.0
    %v1979 = vmax.f32 %v1975, 0.0
    %v1980 = vmax.f32 %v1976, 0.0
    %v1981 = vmul.f32 %v71, %v73
    %v1982 = vmul.f32 %v73, %v73
    %v1987 = vcombine.low %v1977, %v1978
    %v1988 = vcombine.low %v1979, %v1980
    %v1990 = vunpack.c.l.s4 1966171168
    %v1991 = vunpack.c.0.s8 %v1990
    %v1992 = vlaneseq
    %v1993 = vshrl.u32 %v1992, 7
    %v1994 = vsub.s32 %v1991, %v1993
    %v1995 = vrot.slane %v1987, %v1994
    %v1997 = vunpack.c.l.s4 1966171168
    %v1998 = vunpack.c.0.s8 %v1997
    %v1999 = vlaneseq
    %v2000 = vshrl.u32 %v1999, 7
    %v2001 = vsub.s32 %v1998, %v2000
    %v2002 = vrot.slane %v1988, %v2001
    %v2003 = vcombine.low %v1995, %v2002
    %v2005 = vunpack.c.l.s4 1966171168
    %v2006 = vunpack.c.0.s8 %v2005
    %v2007 = vlaneseq
    %v2008 = vshrl.u32 %v2007, 7
    %v2009 = vsub.s32 %v2006, %v2008
    %v2010 = vrot.slane %v2003, %v2009
    %v2012 = vmul.f32 %v1982, %v2010
    %v2013 = vadd.f32 %v2012, 1e-05
    %v2014 = vrsqrt.pop %v2013
    %v2015 = vmul.f32 %v1981, %v2014
    %v2017 = vlaneseq
    %v2018 = vshrl.u32 %v2017, 7
    %v2019 = vsub.s32 0, %v2018
    %v2020 = vrot.slane %v2015, %v2019
    %v2021 = vlaneseq
    %v2022 = vshrl.u32 %v2021, 7
    %v2023 = vsub.s32 1, %v2022
    %v2024 = vrot.slane %v2015, %v2023
    %v2025 = vlaneseq
    %v2026 = vshrl.u32 %v2025, 7
    %v2027 = vsub.s32 2, %v2026
    %v2028 = vrot.slane %v2015, %v2027
    %v2029 = vlaneseq
    %v2030 = vshrl.u32 %v2029, 7
    %v2031 = vsub.s32 3, %v2030
    %v2032 = vrot.slane %v2015, %v2031
    %v2037 = vmul.f32 %v1933, %v2020
    %v2038 = vmul.f32 %v1934, %v2024
    %v2039 = vmul.f32 %v1935, %v2028
    %v2040 = vmul.f32 %v1936, %v2032
    %v2045 = vcombine.low %v2037, %v2038
    %v2046 = vcombine.low %v2039, %v2040
    %v2048 = vunpack.c.l.s4 1966171168
    %v2049 = vunpack.c.0.s8 %v2048
    %v2050 = vlaneseq
    %v2051 = vshrl.u32 %v2050, 7
    %v2052 = vsub.s32 %v2049, %v2051
    %v2053 = vrot.slane %v2045, %v2052
    %v2055 = vunpack.c.l.s4 1966171168
    %v2056 = vunpack.c.0.s8 %v2055
    %v2057 = vlaneseq
    %v2058 = vshrl.u32 %v2057, 7
    %v2059 = vsub.s32 %v2056, %v2058
    %v2060 = vrot.slane %v2046, %v2059
    %v2061 = vcombine.low %v2053, %v2060
    %v2063 = vunpack.c.l.s4 1966171168
    %v2064 = vunpack.c.0.s8 %v2063
    %v2065 = vlaneseq
    %v2066 = vshrl.u32 %v2065, 7
    %v2067 = vsub.s32 %v2064, %v2066
    %v2068 = vrot.slane %v2061, %v2067
    %v2070 = vsub.f32 %v72, %v2068
    %v2071 = vmul.f32 %v1821, %v2020
    %v2072 = vmul.f32 %v1823, %v2024
    %v2073 = vmul.f32 %v1903, %v2028
    %v2074 = vmul.f32 %v1905, %v2032
    %v2076 = vlaneseq
    %v2077 = vshrl.u32 %v2076, 7
    %v2078 = vsub.s32 0, %v2077
    %v2079 = vrot.slane %v2070, %v2078
    %v2080 = vlaneseq
    %v2081 = vshrl.u32 %v2080, 7
    %v2082 = vsub.s32 1, %v2081
    %v2083 = vrot.slane %v2070, %v2082
    %v2084 = vlaneseq
    %v2085 = vshrl.u32 %v2084, 7
    %v2086 = vsub.s32 2, %v2085
    %v2087 = vrot.slane %v2070, %v2086
    %v2088 = vlaneseq
    %v2089 = vshrl.u32 %v2088, 7
    %v2090 = vsub.s32 3, %v2089
    %v2091 = vrot.slane %v2070, %v2090
    %v2096 = vadd.f32 %v2071, %v2079
    %v2097 = vadd.f32 %v2072, %v2083
    %v2098 = vadd.f32 %v2073, %v2087
    %v2099 = vadd.f32 %v2074, %v2091
    %v2100 = vmax.f32 %v2096, 0.0
    %v2101 = vmax.f32 %v2097, 0.0
    %v2102 = vmax.f32 %v2098, 0.0
    %v2103 = vmax.f32 %v2099, 0.0
    %v2104 = vpack.c.bf16 %v2100, %v2100
    %v2105 = vpack.c.bf16 %v2101, %v2101
    %v2106 = vpack.c.bf16 %v2102, %v2102
    %v2107 = vpack.c.bf16 %v2103, %v2103
    %v2108 = vld [vmem:[#allocation6 + $0x40] sm:$0xff]
    %v2109 = vld [vmem:[#allocation6 + $0x48] sm:$0xff]
    %v2110 = vld [vmem:[#allocation6 + $0x90] sm:$0xff]
    %v2111 = vld [vmem:[#allocation6 + $0x98] sm:$0xff]
    %v2112 = vld [vmem:[#allocation6 + $0xe0] sm:$0xff]
    %v2113 = vld [vmem:[#allocation6 + $0xe8] sm:$0xff]
    %v2114 = vld [vmem:[#allocation6 + $0x130] sm:$0xff]
    %v2115 = vld [vmem:[#allocation6 + $0x138] sm:$0xff]
    %v2116 = vld [vmem:[#allocation6 + $0x180] sm:$0xff]
    %v2117 = vld [vmem:[#allocation6 + $0x188] sm:$0xff]
    %v2118 = vld [vmem:[#allocation6 + $0x1d0] sm:$0xff]
    %v2119 = vld [vmem:[#allocation6 + $0x1d8] sm:$0xff]
    %v2120 = vld [vmem:[#allocation6 + $0x220] sm:$0xff]
    %v2121 = vld [vmem:[#allocation6 + $0x228] sm:$0xff]
    %v2122 = vld [vmem:[#allocation6 + $0x270] sm:$0xff]
    %v2123 = vld [vmem:[#allocation6 + $0x278] sm:$0xff]
    %v2124 = vld [vmem:[#allocation6 + $0x2c0] sm:$0xff]
    %v2125 = vld [vmem:[#allocation6 + $0x2c8] sm:$0xff]
    %v2126 = vld [vmem:[#allocation6 + $0x310] sm:$0xff]
    %v2127 = vld [vmem:[#allocation6 + $0x318] sm:$0xff]
    %v2128 = vld [vmem:[#allocation6 + $0x360] sm:$0xff]
    %v2129 = vld [vmem:[#allocation6 + $0x368] sm:$0xff]
    %v2130 = vld [vmem:[#allocation6 + $0x3b0] sm:$0xff]
    %v2131 = vld [vmem:[#allocation6 + $0x3b8] sm:$0xff]
    %v2132 = vld [vmem:[#allocation6 + $0x400] sm:$0xff]
    %v2133 = vld [vmem:[#allocation6 + $0x408] sm:$0xff]
    %v2134 = vld [vmem:[#allocation6 + $0x450] sm:$0xff]
    %v2135 = vld [vmem:[#allocation6 + $0x458] sm:$0xff]
    %v2136 = vld [vmem:[#allocation6 + $0x4a0] sm:$0xff]
    %v2137 = vld [vmem:[#allocation6 + $0x4a8] sm:$0xff]
    %v2138 = vld [vmem:[#allocation6 + $0x4f0] sm:$0xff]
    %v2139 = vld [vmem:[#allocation6 + $0x4f8] sm:$0xff]
    %v2140 = vunpack.c.l.s8.bf16 %v2108
    %v2141 = vunpack.c.l.s8.bf16 %v2109
    %v2142 = vunpack.c.h.s8.bf16 %v2108
    %v2143 = vunpack.c.h.s8.bf16 %v2109
    %v2144 = vunpack.c.l.s8.bf16 %v2110
    %v2145 = vunpack.c.l.s8.bf16 %v2111
    %v2146 = vunpack.c.h.s8.bf16 %v2110
    %v2147 = vunpack.c.h.s8.bf16 %v2111
    %v2148 = vunpack.c.l.s8.bf16 %v2112
    %v2149 = vunpack.c.l.s8.bf16 %v2113
    %v2150 = vunpack.c.h.s8.bf16 %v2112
    %v2151 = vunpack.c.h.s8.bf16 %v2113
    %v2152 = vunpack.c.l.s8.bf16 %v2114
    %v2153 = vunpack.c.l.s8.bf16 %v2115
    %v2154 = vunpack.c.h.s8.bf16 %v2114
    %v2155 = vunpack.c.h.s8.bf16 %v2115
    %v2156 = vunpack.c.l.s8.bf16 %v2116
    %v2157 = vunpack.c.l.s8.bf16 %v2117
    %v2158 = vunpack.c.h.s8.bf16 %v2116
    %v2159 = vunpack.c.h.s8.bf16 %v2117
    %v2160 = vunpack.c.l.s8.bf16 %v2118
    %v2161 = vunpack.c.l.s8.bf16 %v2119
    %v2162 = vunpack.c.h.s8.bf16 %v2118
    %v2163 = vunpack.c.h.s8.bf16 %v2119
    %v2164 = vunpack.c.l.s8.bf16 %v2120
    %v2165 = vunpack.c.l.s8.bf16 %v2121
    %v2166 = vunpack.c.h.s8.bf16 %v2120
    %v2167 = vunpack.c.h.s8.bf16 %v2121
    %v2168 = vunpack.c.l.s8.bf16 %v2122
    %v2169 = vunpack.c.l.s8.bf16 %v2123
    %v2170 = vunpack.c.h.s8.bf16 %v2122
    %v2171 = vunpack.c.h.s8.bf16 %v2123
    %v2172 = vunpack.c.l.s8.bf16 %v2124
    %v2173 = vunpack.c.l.s8.bf16 %v2125
    %v2174 = vunpack.c.h.s8.bf16 %v2124
    %v2175 = vunpack.c.h.s8.bf16 %v2125
    %v2176 = vunpack.c.l.s8.bf16 %v2126
    %v2177 = vunpack.c.l.s8.bf16 %v2127
    %v2178 = vunpack.c.h.s8.bf16 %v2126
    %v2179 = vunpack.c.h.s8.bf16 %v2127
    %v2180 = vunpack.c.l.s8.bf16 %v2128
    %v2181 = vunpack.c.l.s8.bf16 %v2129
    %v2182 = vunpack.c.h.s8.bf16 %v2128
    %v2183 = vunpack.c.h.s8.bf16 %v2129
    %v2184 = vunpack.c.l.s8.bf16 %v2130
    %v2185 = vunpack.c.l.s8.bf16 %v2131
    %v2186 = vunpack.c.h.s8.bf16 %v2130
    %v2187 = vunpack.c.h.s8.bf16 %v2131
    %v2188 = vunpack.c.l.s8.bf16 %v2132
    %v2189 = vunpack.c.l.s8.bf16 %v2133
    %v2190 = vunpack.c.h.s8.bf16 %v2132
    %v2191 = vunpack.c.h.s8.bf16 %v2133
    %v2192 = vunpack.c.l.s8.bf16 %v2134
    %v2193 = vunpack.c.l.s8.bf16 %v2135
    %v2194 = vunpack.c.h.s8.bf16 %v2134
    %v2195 = vunpack.c.h.s8.bf16 %v2135
    %v2196 = vunpack.c.l.s8.bf16 %v2136
    %v2197 = vunpack.c.l.s8.bf16 %v2137
    %v2198 = vunpack.c.h.s8.bf16 %v2136
    %v2199 = vunpack.c.h.s8.bf16 %v2137
    %v2200 = vunpack.c.l.s8.bf16 %v2138
    %v2201 = vunpack.c.l.s8.bf16 %v2139
    %v2202 = vunpack.c.h.s8.bf16 %v2138
    %v2203 = vunpack.c.h.s8.bf16 %v2139
    %2204 = vmatprep.subr.bf16.mxu0 %v2155
    %2205 = vmatpush1.bf16.msra.mxu0 %v2154
    %2206 = vmatprep.subr.bf16.mxu0 %v2153
    %2207 = vmatpush1.bf16.msra.mxu0 %v2152
    %2208 = vmatprep.subr.bf16.mxu0 %v2151
    %2209 = vmatpush1.bf16.msra.mxu0 %v2150
    %2210 = vmatprep.subr.bf16.mxu0 %v2149
    %2211 = vmatpush1.bf16.msra.mxu0 %v2148
    %2212 = vmatprep.subr.bf16.mxu0 %v2147
    %2213 = vmatpush1.bf16.msra.mxu0 %v2146
    %2214 = vmatprep.subr.bf16.mxu0 %v2145
    %2215 = vmatpush1.bf16.msra.mxu0 %v2144
    %2216 = vmatprep.subr.bf16.mxu0 %v2143
    %2217 = vmatpush1.bf16.msra.mxu0 %v2142
    %2218 = vmatprep.subr.bf16.mxu0 %v2141
    %2219 = vmatpush1.bf16.msra.mxu0 %v2140
    %2220 = vmatprep.subr.bf16.mxu0 %v2171
    %2221 = vmatpush2.bf16.msra.mxu0 %v2170
    %2222 = vmatprep.subr.bf16.mxu0 %v2169
    %2223 = vmatpush2.bf16.msra.mxu0 %v2168
    %2224 = vmatprep.subr.bf16.mxu0 %v2167
    %2225 = vmatpush2.bf16.msra.mxu0 %v2166
    %2226 = vmatprep.subr.bf16.mxu0 %v2165
    %2227 = vmatpush2.bf16.msra.mxu0 %v2164
    %2228 = vmatprep.subr.bf16.mxu0 %v2163
    %2229 = vmatpush2.bf16.msra.mxu0 %v2162
    %2230 = vmatprep.subr.bf16.mxu0 %v2161
    %2231 = vmatpush2.bf16.msra.mxu0 %v2160
    %2232 = vmatprep.subr.bf16.mxu0 %v2159
    %2233 = vmatpush2.bf16.msra.mxu0 %v2158
    %2234 = vmatprep.subr.bf16.mxu0 %v2157
    %2235 = vmatpush2.bf16.msra.mxu0 %v2156
    %2236 = vmatprep.mubr.bf16.mxu0 %v2105
    %2237 = vmatmul.mubr.bf16.gmra.mxu0 %v2104
    %v2238 = vpop.f32.mrf.mxu0
    %v2239 = vadd.f32 0.0, %v2238
    %v2240 = vpop.f32.mrf.mxu0
    %v2241 = vadd.f32 0.0, %v2240
    %v2242 = vpop.f32.mrf.mxu0
    %v2243 = vpop.f32.mrf.mxu0
    %2244 = vdwg.mxu0
    %2245 = vmatprep.subr.bf16.mxu0 %v2187
    %2246 = vmatpush1.bf16.msra.mxu0 %v2186
    %2247 = vmatprep.subr.bf16.mxu0 %v2185
    %2248 = vmatpush1.bf16.msra.mxu0 %v2184
    %2249 = vmatprep.subr.bf16.mxu0 %v2183
    %2250 = vmatpush1.bf16.msra.mxu0 %v2182
    %2251 = vmatprep.subr.bf16.mxu0 %v2181
    %2252 = vmatpush1.bf16.msra.mxu0 %v2180
    %2253 = vmatprep.subr.bf16.mxu0 %v2179
    %2254 = vmatpush1.bf16.msra.mxu0 %v2178
    %2255 = vmatprep.subr.bf16.mxu0 %v2177
    %2256 = vmatpush1.bf16.msra.mxu0 %v2176
    %2257 = vmatprep.subr.bf16.mxu0 %v2175
    %2258 = vmatpush1.bf16.msra.mxu0 %v2174
    %2259 = vmatprep.subr.bf16.mxu0 %v2173
    %2260 = vmatpush1.bf16.msra.mxu0 %v2172
    %2261 = vmatprep.subr.bf16.mxu0 %v2203
    %2262 = vmatpush2.bf16.msra.mxu0 %v2202
    %2263 = vmatprep.subr.bf16.mxu0 %v2201
    %2264 = vmatpush2.bf16.msra.mxu0 %v2200
    %2265 = vmatprep.subr.bf16.mxu0 %v2199
    %2266 = vmatpush2.bf16.msra.mxu0 %v2198
    %2267 = vmatprep.subr.bf16.mxu0 %v2197
    %2268 = vmatpush2.bf16.msra.mxu0 %v2196
    %2269 = vmatprep.subr.bf16.mxu0 %v2195
    %2270 = vmatpush2.bf16.msra.mxu0 %v2194
    %2271 = vmatprep.subr.bf16.mxu0 %v2193
    %2272 = vmatpush2.bf16.msra.mxu0 %v2192
    %2273 = vmatprep.subr.bf16.mxu0 %v2191
    %2274 = vmatpush2.bf16.msra.mxu0 %v2190
    %2275 = vmatprep.subr.bf16.mxu0 %v2189
    %2276 = vmatpush2.bf16.msra.mxu0 %v2188
    %2277 = vmatprep.mubr.bf16.mxu0 %v2107
    %2278 = vmatmul.mubr.bf16.gmra.mxu0 %v2106
    %v2279 = vpop.f32.mrf.mxu0
    %v2280 = vadd.f32 %v2239, %v2279
    %v2281 = vpop.f32.mrf.mxu0
    %v2282 = vadd.f32 %v2241, %v2281
    %v2283 = vpop.f32.mrf.mxu0
    %v2284 = vpop.f32.mrf.mxu0
    %2285 = vdwg.mxu0
    %v2286 = vrot.slane %v2280, 4
    %v2287 = vadd.f32 %v2280, %v2286
    %v2288 = vrot.slane %v2287, 2
    %v2289 = vadd.f32 %v2287, %v2288
    %v2290 = vrot.slane %v2289, 1
    %v2291 = vadd.f32 %v2289, %v2290
    %v2292 = vrot.slane %v2282, 4
    %v2293 = vadd.f32 %v2282, %v2292
    %v2294 = vrot.slane %v2293, 2
    %v2295 = vadd.f32 %v2293, %v2294
    %v2296 = vrot.slane %v2295, 1
    %v2297 = vadd.f32 %v2295, %v2296
    %v2298 = vmul.f32 %v2291, %v855
    %v2299 = vmul.f32 %v2297, %v855
    %v2300 = vmul.f32 %v2280, %v2280
    %v2301 = vmul.f32 %v2282, %v2282
    %v2302 = vrot.slane %v2300, 4
    %v2303 = vadd.f32 %v2300, %v2302
    %v2304 = vrot.slane %v2303, 2
    %v2305 = vadd.f32 %v2303, %v2304
    %v2306 = vrot.slane %v2305, 1
    %v2307 = vadd.f32 %v2305, %v2306
    %v2308 = vrot.slane %v2301, 4
    %v2309 = vadd.f32 %v2301, %v2308
    %v2310 = vrot.slane %v2309, 2
    %v2311 = vadd.f32 %v2309, %v2310
    %v2312 = vrot.slane %v2311, 1
    %v2313 = vadd.f32 %v2311, %v2312
    %v2314 = vmul.f32 %v2307, %v855
    %v2315 = vmul.f32 %v2313, %v855
    %v2316 = vmul.f32 %v2298, %v2298
    %v2317 = vmul.f32 %v2299, %v2299
    %v2318 = vsub.f32 %v2314, %v2316
    %v2319 = vsub.f32 %v2315, %v2317
    %v2320 = vmax.f32 %v2318, 0.0
    %v2321 = vmax.f32 %v2319, 0.0
    %v2322 = vmul.f32 %v74, %v76
    %v2323 = vmul.f32 %v76, %v76
    %v2326 = vcombine.low %v2320, %v2321
    %v2328 = vunpack.c.l.s4 1966171168
    %v2329 = vunpack.c.0.s8 %v2328
    %v2330 = vlaneseq
    %v2331 = vshrl.u32 %v2330, 7
    %v2332 = vsub.s32 %v2329, %v2331
    %v2333 = vrot.slane %v2326, %v2332
    %v2335 = vunpack.c.l.s4 1966171168
    %v2336 = vunpack.c.0.s8 %v2335
    %v2337 = vlaneseq
    %v2338 = vshrl.u32 %v2337, 7
    %v2339 = vsub.s32 %v2336, %v2338
    %v2340 = vrot.slane %v2333, %v2339
    %v2342 = vmul.f32 %v2323, %v2340
    %v2343 = vadd.f32 %v2342, 1e-05
    %v2344 = vrsqrt.pop %v2343
    %v2345 = vmul.f32 %v2322, %v2344
    %v2347 = vlaneseq
    %v2348 = vshrl.u32 %v2347, 7
    %v2349 = vsub.s32 0, %v2348
    %v2350 = vrot.slane %v2345, %v2349
    %v2351 = vlaneseq
    %v2352 = vshrl.u32 %v2351, 7
    %v2353 = vsub.s32 1, %v2352
    %v2354 = vrot.slane %v2345, %v2353
    %v2357 = vmul.f32 %v2298, %v2350
    %v2358 = vmul.f32 %v2299, %v2354
    %v2361 = vcombine.low %v2357, %v2358
    %v2363 = vunpack.c.l.s4 1966171168
    %v2364 = vunpack.c.0.s8 %v2363
    %v2365 = vlaneseq
    %v2366 = vshrl.u32 %v2365, 7
    %v2367 = vsub.s32 %v2364, %v2366
    %v2368 = vrot.slane %v2361, %v2367
    %v2370 = vunpack.c.l.s4 1966171168
    %v2371 = vunpack.c.0.s8 %v2370
    %v2372 = vlaneseq
    %v2373 = vshrl.u32 %v2372, 7
    %v2374 = vsub.s32 %v2371, %v2373
    %v2375 = vrot.slane %v2368, %v2374
    %v2377 = vsub.f32 %v75, %v2375
    %v2378 = vmul.f32 %v2280, %v2350
    %v2379 = vmul.f32 %v2282, %v2354
    %v2381 = vlaneseq
    %v2382 = vshrl.u32 %v2381, 7
    %v2383 = vsub.s32 0, %v2382
    %v2384 = vrot.slane %v2377, %v2383
    %v2385 = vlaneseq
    %v2386 = vshrl.u32 %v2385, 7
    %v2387 = vsub.s32 1, %v2386
    %v2388 = vrot.slane %v2377, %v2387
    %v2391 = vadd.f32 %v2378, %v2384
    %v2392 = vadd.f32 %v2379, %v2388
    %v2393 = vmax.f32 %v2391, 0.0
    %v2394 = vmax.f32 %v2392, 0.0
    %v2396 = vlaneseq
    %v2397 = vshrl.u32 %v2396, 7
    %v2398 = vsub.s32 0, %v2397
    %v2399 = vrot.slane %v77, %v2398
    %v2400 = vlaneseq
    %v2401 = vshrl.u32 %v2400, 7
    %v2402 = vsub.s32 1, %v2401
    %v2403 = vrot.slane %v77, %v2402
    %v2406 = vmul.f32 %v2393, %v2399
    %v2407 = vmul.f32 %v2394, %v2403
    %v2408 = vadd.f32 %v2406, %v2407
    %2409 = vadd.xlane.f32.xlu0 %v2408
    %v2410 = vpop.xlane.xlu0 %2409
    %v2412 = vlaneseq
    %v2413 = vshrl.u32 %v2412, 7
    %v2414 = vsub.s32 0, %v2413
    %v2415 = vrot.slane %v78, %v2414
    %v2417 = vadd.f32 %v2410, %v2415
    %v2418 = vmax.f32 %v2417, 0.0
    %vm2419 = vcmask 7168
    %2420 = vst.msk [vmem:[%s4] sm:$0xff] %vm2419, %v2418
    // Predicated region
    $region34: #{tpu_custom_call.1} parent=1 // pred_check
      _
    $region35: #{tpu_custom_call.1} parent=1 // pred_check_branch
      %2422 = sbr.rel (0) target = $region37
    $region36: #{tpu_custom_call.1} parent=1 // pred_region
      _
    $region37: #{tpu_custom_call.1} parent=1 // pred_fallthru
      _
    // Predicated region
    $region38: #{tpu_custom_call.1} parent=1 // pred_check
      _
    $region39: #{tpu_custom_call.1} parent=1 // pred_check_branch
      %2424 = sbr.rel (0) target = $region41
    $region40: #{tpu_custom_call.1} parent=1 // pred_region
      _
    $region41: #{tpu_custom_call.1} parent=1 // pred_fallthru
      _
    %2425 = vsyncpa [#allocation3], 1
    %2426 = vsyncpa [#allocation5], 1
    %2427 = vsyncpa [#allocation8], 1

</llo_original>
